<compile_context>
chip_gen: v6e
topology: v6e:2x2x1
jax: 0.10.0
libtpu: 0.0.40
codegen_flags: <defaults>
</compile_context>

<pallas_src>
import jax
import jax.numpy as jnp
from jax.experimental import pallas as pl
from jax.experimental.pallas import tpu as pltpu

INPUT_SIZE_LSTM = 16   # INPUT_SIZE_LSTM is undefined in the reference file; pick 16.
HIDDEN = 32
OUT_DIM = 10


def make_lstm_kernel(T, B):
    """Builds the kernel with static sequence length / batch."""
    H = HIDDEN

    def kernel(x2d_ref, w_ih_t_ref, w_hh_t_ref, b_ref, w_out_t_ref, b_out_ref,
               h0_ref, c0_ref,
               out_ref, hn_ref, cn_ref,
               xw_ref, hbuf_ref):
        # --- Batched input projection for ALL timesteps (one MXU call, T*B rows),
        #     bias folded in once.  xw_ref: (T*B, 4H) VMEM scratch. -------------
        xw_ref[...] = (jnp.dot(x2d_ref[...], w_ih_t_ref[...],
                               preferred_element_type=jnp.float32)
                       + b_ref[...])

        # Hoisted recurrent weight read (single load, reused every step).
        w_hh_t = w_hh_t_ref[...]                       # (H, 4H)

        h = h0_ref[...]                                # (B, H)
        c = c0_ref[...]                                # (B, H)

        # --- Time recurrence, fully unrolled (T is small & static). ------------
        # gates layout matches PyTorch: [i | f | g | o], each of width HIDDEN.
        for t in range(T):
            gates = xw_ref[t * B:(t + 1) * B, :] + jnp.dot(
                h, w_hh_t, preferred_element_type=jnp.float32)   # (B, 4H)

            i_g = jax.nn.sigmoid(gates[:, 0 * H:1 * H])
            f_g = jax.nn.sigmoid(gates[:, 1 * H:2 * H])
            g_g = jnp.tanh(      gates[:, 2 * H:3 * H])
            o_g = jax.nn.sigmoid(gates[:, 3 * H:4 * H])

            c = f_g * c + i_g * g_g
            h = o_g * jnp.tanh(c)

            # Park h_t in the resident hidden-state slab (no HBM traffic here).
            hbuf_ref[t * B:(t + 1) * B, :] = h

        hn_ref[...] = h
        cn_ref[...] = c

        # --- Batched output projection: one matmul + one store for the whole
        #     sequence (replaces T masked per-step stores). ---------------------
        out_ref[...] = (jnp.dot(hbuf_ref[...], w_out_t_ref[...],
                                preferred_element_type=jnp.float32)
                        + b_out_ref[...]).astype(out_ref.dtype)

    return kernel


def lstm_forward(x, h_state, params):
    """x: (B, T, I) batch-first.  h_state: (h0, c0) each (1, B, H).
    Returns (outs (B, T, 10), (h_n, c_n))."""
    B, T, I = x.shape
    h0 = h_state[0][0]                      # (B, H)
    c0 = h_state[1][0]                      # (B, H)

    # Time-major rows: row t*B + b == x[b, t, :].  (Tiny tensor; one XLA pass.)
    x2d = jnp.transpose(x, (1, 0, 2)).reshape(T * B, I)

    w_ih_t = params["w_ih"].T               # (I, 4H)
    w_hh_t = params["w_hh"].T               # (H, 4H)
    b = (params["b_ih"] + params["b_hh"])[None, :]   # (1, 4H)
    w_out_t = params["w_out"].T             # (H, 10)
    b_out = params["b_out"][None, :]        # (1, 10)

    vmem_spec = pl.BlockSpec(memory_space=pltpu.MemorySpace.VMEM)

    out2d, hn, cn = pl.pallas_call(
        make_lstm_kernel(T, B),
        out_shape=(
            jax.ShapeDtypeStruct((T * B, OUT_DIM), jnp.float32),
            jax.ShapeDtypeStruct((B, HIDDEN), jnp.float32),
            jax.ShapeDtypeStruct((B, HIDDEN), jnp.float32),
        ),
        in_specs=[vmem_spec] * 8,
        out_specs=(vmem_spec, vmem_spec, vmem_spec),
        scratch_shapes=[
            pltpu.VMEM((T * B, 4 * HIDDEN), jnp.float32),   # pre-projected x
            pltpu.VMEM((T * B, HIDDEN), jnp.float32),       # all hidden states
        ],
    )(x2d, w_ih_t, w_hh_t, b, w_out_t, b_out, h0, c0)

    outs = jnp.transpose(out2d.reshape(T, B, OUT_DIM), (1, 0, 2))   # (B, T, 10)
    return outs, (hn[None], cn[None])


def lstm_reference(x, h_state, params):
    """Pure-JAX reference (PyTorch LSTM semantics) for validation."""
    h = h_state[0][0]
    c = h_state[1][0]
    w_ih, w_hh = params["w_ih"], params["w_hh"]
    b = params["b_ih"] + params["b_hh"]

    def step(carry, x_t):
        h, c = carry
        gates = x_t @ w_ih.T + h @ w_hh.T + b
        i, f, g, o = jnp.split(gates, 4, axis=-1)
        i, f, o = jax.nn.sigmoid(i), jax.nn.sigmoid(f), jax.nn.sigmoid(o)
        g = jnp.tanh(g)
        c = f * c + i * g
        h = o * jnp.tanh(c)
        y = h @ params["w_out"].T + params["b_out"]
        return (h, c), y

    (h, c), ys = jax.lax.scan(step, (h, c), jnp.transpose(x, (1, 0, 2)))
    return jnp.transpose(ys, (1, 0, 2)), (h[None], c[None])


def init_params(key):
    k = 1.0 / jnp.sqrt(HIDDEN)
    ks = jax.random.split(key, 6)
    return {
        "w_ih": jax.random.uniform(ks[0], (4 * HIDDEN, INPUT_SIZE_LSTM),
                                   jnp.float32, -k, k),
        "w_hh": jax.random.uniform(ks[1], (4 * HIDDEN, HIDDEN),
                                   jnp.float32, -k, k),
        "b_ih": jax.random.uniform(ks[2], (4 * HIDDEN,), jnp.float32, -k, k),
        "b_hh": jax.random.uniform(ks[3], (4 * HIDDEN,), jnp.float32, -k, k),
        "w_out": jax.random.uniform(ks[4], (OUT_DIM, HIDDEN),
                                    jnp.float32, -k, k),
        "b_out": jax.random.uniform(ks[5], (OUT_DIM,), jnp.float32, -k, k),
    }


if __name__ == "__main__":
    key = jax.random.PRNGKey(0)
    kp, kx, kh, kc = jax.random.split(key, 4)

    B, T = 2, 8
    params = init_params(kp)
    x = jax.random.normal(kx, (B, T, INPUT_SIZE_LSTM), jnp.float32)
    h0 = jax.random.normal(kh, (1, B, HIDDEN), jnp.float32)
    c0 = jax.random.normal(kc, (1, B, HIDDEN), jnp.float32)

    outs, (hn, cn) = lstm_forward(x, (h0, c0), params)
    jax.block_until_ready((outs, hn, cn))

    ref_outs, (ref_hn, ref_cn) = lstm_reference(x, (h0, c0), params)
    assert outs.shape == (B, T, OUT_DIM)
    assert hn.shape == (1, B, HIDDEN) and cn.shape == (1, B, HIDDEN)
    assert jnp.allclose(outs, ref_outs, atol=1e-5, rtol=1e-5)
    assert jnp.allclose(hn, ref_hn, atol=1e-5, rtol=1e-5)
    assert jnp.allclose(cn, ref_cn, atol=1e-5, rtol=1e-5)

    print("KERNEL_OK")
</pallas_src>

<mosaic_0001>
module attributes {stable_mosaic.version = 11 : i64} {
  func.func @kernel(%arg0: memref<16x16xf32, #tpu.memory_space<vmem>>, %arg1: memref<16x128xf32, #tpu.memory_space<vmem>>, %arg2: memref<32x128xf32, #tpu.memory_space<vmem>>, %arg3: memref<1x128xf32, #tpu.memory_space<vmem>>, %arg4: memref<32x10xf32, #tpu.memory_space<vmem>>, %arg5: memref<1x10xf32, #tpu.memory_space<vmem>>, %arg6: memref<2x32xf32, #tpu.memory_space<vmem>>, %arg7: memref<2x32xf32, #tpu.memory_space<vmem>>, %arg8: memref<16x10xf32, #tpu.memory_space<vmem>>, %arg9: memref<2x32xf32, #tpu.memory_space<vmem>>, %arg10: memref<2x32xf32, #tpu.memory_space<vmem>>, %arg11: memref<16x128xf32, #tpu.memory_space<vmem>>, %arg12: memref<16x32xf32, #tpu.memory_space<vmem>>) attributes {dimension_semantics = [], scalar_prefetch = 0 : i64, scratch_operands = 2 : i64, tpu.core_type = #tpu.core_type<tc>} {
    %c0 = arith.constant 0 : index
    %c0_0 = arith.constant 0 : index
    %0 = vector.load %arg0[%c0, %c0_0] : memref<16x16xf32, #tpu.memory_space<vmem>>, vector<16x16xf32>
    %c0_1 = arith.constant 0 : index
    %c0_2 = arith.constant 0 : index
    %1 = vector.load %arg1[%c0_1, %c0_2] : memref<16x128xf32, #tpu.memory_space<vmem>>, vector<16x128xf32>
    %cst = arith.constant dense<0.000000e+00> : vector<16x128xf32>
    %2 = tpu.matmul %0, %1, %cst {dimension_numbers = #tpu.dot_dimension_numbers<[1], [0], [0], [1], [0, 0, 1, 1], [], []>} : vector<16x16xf32>, vector<16x128xf32>, vector<16x128xf32> -> vector<16x128xf32>
    %c0_3 = arith.constant 0 : index
    %c0_4 = arith.constant 0 : index
    %3 = vector.load %arg3[%c0_3, %c0_4] : memref<1x128xf32, #tpu.memory_space<vmem>>, vector<1x128xf32>
    %4 = vector.broadcast %3 : vector<1x128xf32> to vector<16x128xf32>
    %5 = arith.addf %2, %4 : vector<16x128xf32>
    %c0_5 = arith.constant 0 : index
    %c0_6 = arith.constant 0 : index
    %6 = vector.load %arg11[%c0_5, %c0_6] : memref<16x128xf32, #tpu.memory_space<vmem>>, vector<16x128xf32>
    tpu.vector_store %arg11[%c0_5, %c0_6], %5 {strides = array<i32>} : memref<16x128xf32, #tpu.memory_space<vmem>>, vector<16x128xf32>,
    %c0_7 = arith.constant 0 : index
    %c0_8 = arith.constant 0 : index
    %7 = vector.load %arg2[%c0_7, %c0_8] : memref<32x128xf32, #tpu.memory_space<vmem>>, vector<32x128xf32>
    %c0_9 = arith.constant 0 : index
    %c0_10 = arith.constant 0 : index
    %8 = vector.load %arg6[%c0_9, %c0_10] : memref<2x32xf32, #tpu.memory_space<vmem>>, vector<2x32xf32>
    %c0_11 = arith.constant 0 : index
    %c0_12 = arith.constant 0 : index
    %9 = vector.load %arg7[%c0_11, %c0_12] : memref<2x32xf32, #tpu.memory_space<vmem>>, vector<2x32xf32>
    %c0_13 = arith.constant 0 : index
    %c0_14 = arith.constant 0 : index
    %10 = vector.load %arg11[%c0_13, %c0_14] : memref<16x128xf32, #tpu.memory_space<vmem>>, vector<2x128xf32>
    %cst_15 = arith.constant dense<0.000000e+00> : vector<2x128xf32>
    %11 = tpu.matmul %8, %7, %cst_15 {dimension_numbers = #tpu.dot_dimension_numbers<[1], [0], [0], [1], [0, 0, 1, 1], [], []>} : vector<2x32xf32>, vector<32x128xf32>, vector<2x128xf32> -> vector<2x128xf32>
    %12 = arith.addf %10, %11 : vector<2x128xf32>
    %13 = vector.extract_strided_slice %12 {offsets = [0, 0], sizes = [2, 32], strides = [1, 1]} : vector<2x128xf32> to vector<2x32xf32>
    %14 = arith.negf %13 : vector<2x32xf32>
    %15 = math.exp %14 : vector<2x32xf32>
    %cst_16 = arith.constant 1.000000e+00 : f32
    %16 = vector.broadcast %cst_16 : f32 to vector<2x32xf32>
    %17 = arith.addf %16, %15 : vector<2x32xf32>
    %18 = arith.divf %16, %17 : vector<2x32xf32>
    %19 = vector.extract_strided_slice %12 {offsets = [0, 32], sizes = [2, 32], strides = [1, 1]} : vector<2x128xf32> to vector<2x32xf32>
    %20 = arith.negf %19 : vector<2x32xf32>
    %21 = math.exp %20 : vector<2x32xf32>
    %cst_17 = arith.constant 1.000000e+00 : f32
    %22 = vector.broadcast %cst_17 : f32 to vector<2x32xf32>
    %23 = arith.addf %22, %21 : vector<2x32xf32>
    %24 = arith.divf %22, %23 : vector<2x32xf32>
    %25 = vector.extract_strided_slice %12 {offsets = [0, 64], sizes = [2, 32], strides = [1, 1]} : vector<2x128xf32> to vector<2x32xf32>
    %26 = math.tanh %25 : vector<2x32xf32>
    %27 = vector.extract_strided_slice %12 {offsets = [0, 96], sizes = [2, 32], strides = [1, 1]} : vector<2x128xf32> to vector<2x32xf32>
    %28 = arith.negf %27 : vector<2x32xf32>
    %29 = math.exp %28 : vector<2x32xf32>
    %cst_18 = arith.constant 1.000000e+00 : f32
    %30 = vector.broadcast %cst_18 : f32 to vector<2x32xf32>
    %31 = arith.addf %30, %29 : vector<2x32xf32>
    %32 = arith.divf %30, %31 : vector<2x32xf32>
    %33 = arith.mulf %24, %9 : vector<2x32xf32>
    %34 = arith.mulf %18, %26 : vector<2x32xf32>
    %35 = arith.addf %33, %34 : vector<2x32xf32>
    %36 = math.tanh %35 : vector<2x32xf32>
    %37 = arith.mulf %32, %36 : vector<2x32xf32>
    %c0_19 = arith.constant 0 : index
    %c0_20 = arith.constant 0 : index
    %38 = vector.load %arg12[%c0_19, %c0_20] : memref<16x32xf32, #tpu.memory_space<vmem>>, vector<2x32xf32>
    tpu.vector_store %arg12[%c0_19, %c0_20], %37 {strides = array<i32>} : memref<16x32xf32, #tpu.memory_space<vmem>>, vector<2x32xf32>,
    %c2 = arith.constant 2 : index
    %c0_21 = arith.constant 0 : index
    %39 = vector.load %arg11[%c2, %c0_21] : memref<16x128xf32, #tpu.memory_space<vmem>>, vector<2x128xf32>
    %cst_22 = arith.constant dense<0.000000e+00> : vector<2x128xf32>
    %40 = tpu.matmul %37, %7, %cst_22 {dimension_numbers = #tpu.dot_dimension_numbers<[1], [0], [0], [1], [0, 0, 1, 1], [], []>} : vector<2x32xf32>, vector<32x128xf32>, vector<2x128xf32> -> vector<2x128xf32>
    %41 = arith.addf %39, %40 : vector<2x128xf32>
    %42 = vector.extract_strided_slice %41 {offsets = [0, 0], sizes = [2, 32], strides = [1, 1]} : vector<2x128xf32> to vector<2x32xf32>
    %43 = arith.negf %42 : vector<2x32xf32>
    %44 = math.exp %43 : vector<2x32xf32>
    %cst_23 = arith.constant 1.000000e+00 : f32
    %45 = vector.broadcast %cst_23 : f32 to vector<2x32xf32>
    %46 = arith.addf %45, %44 : vector<2x32xf32>
    %47 = arith.divf %45, %46 : vector<2x32xf32>
    %48 = vector.extract_strided_slice %41 {offsets = [0, 32], sizes = [2, 32], strides = [1, 1]} : vector<2x128xf32> to vector<2x32xf32>
    %49 = arith.negf %48 : vector<2x32xf32>
    %50 = math.exp %49 : vector<2x32xf32>
    %cst_24 = arith.constant 1.000000e+00 : f32
    %51 = vector.broadcast %cst_24 : f32 to vector<2x32xf32>
    %52 = arith.addf %51, %50 : vector<2x32xf32>
    %53 = arith.divf %51, %52 : vector<2x32xf32>
    %54 = vector.extract_strided_slice %41 {offsets = [0, 64], sizes = [2, 32], strides = [1, 1]} : vector<2x128xf32> to vector<2x32xf32>
    %55 = math.tanh %54 : vector<2x32xf32>
    %56 = vector.extract_strided_slice %41 {offsets = [0, 96], sizes = [2, 32], strides = [1, 1]} : vector<2x128xf32> to vector<2x32xf32>
    %57 = arith.negf %56 : vector<2x32xf32>
    %58 = math.exp %57 : vector<2x32xf32>
    %cst_25 = arith.constant 1.000000e+00 : f32
    %59 = vector.broadcast %cst_25 : f32 to vector<2x32xf32>
    %60 = arith.addf %59, %58 : vector<2x32xf32>
    %61 = arith.divf %59, %60 : vector<2x32xf32>
    %62 = arith.mulf %53, %35 : vector<2x32xf32>
    %63 = arith.mulf %47, %55 : vector<2x32xf32>
    %64 = arith.addf %62, %63 : vector<2x32xf32>
    %65 = math.tanh %64 : vector<2x32xf32>
    %66 = arith.mulf %61, %65 : vector<2x32xf32>
    %c2_26 = arith.constant 2 : index
    %c0_27 = arith.constant 0 : index
    %67 = vector.load %arg12[%c2_26, %c0_27] : memref<16x32xf32, #tpu.memory_space<vmem>>, vector<2x32xf32>
    tpu.vector_store %arg12[%c2_26, %c0_27], %66 {strides = array<i32>} : memref<16x32xf32, #tpu.memory_space<vmem>>, vector<2x32xf32>,
    %c4 = arith.constant 4 : index
    %c0_28 = arith.constant 0 : index
    %68 = vector.load %arg11[%c4, %c0_28] : memref<16x128xf32, #tpu.memory_space<vmem>>, vector<2x128xf32>
    %cst_29 = arith.constant dense<0.000000e+00> : vector<2x128xf32>
    %69 = tpu.matmul %66, %7, %cst_29 {dimension_numbers = #tpu.dot_dimension_numbers<[1], [0], [0], [1], [0, 0, 1, 1], [], []>} : vector<2x32xf32>, vector<32x128xf32>, vector<2x128xf32> -> vector<2x128xf32>
    %70 = arith.addf %68, %69 : vector<2x128xf32>
    %71 = vector.extract_strided_slice %70 {offsets = [0, 0], sizes = [2, 32], strides = [1, 1]} : vector<2x128xf32> to vector<2x32xf32>
    %72 = arith.negf %71 : vector<2x32xf32>
    %73 = math.exp %72 : vector<2x32xf32>
    %cst_30 = arith.constant 1.000000e+00 : f32
    %74 = vector.broadcast %cst_30 : f32 to vector<2x32xf32>
    %75 = arith.addf %74, %73 : vector<2x32xf32>
    %76 = arith.divf %74, %75 : vector<2x32xf32>
    %77 = vector.extract_strided_slice %70 {offsets = [0, 32], sizes = [2, 32], strides = [1, 1]} : vector<2x128xf32> to vector<2x32xf32>
    %78 = arith.negf %77 : vector<2x32xf32>
    %79 = math.exp %78 : vector<2x32xf32>
    %cst_31 = arith.constant 1.000000e+00 : f32
    %80 = vector.broadcast %cst_31 : f32 to vector<2x32xf32>
    %81 = arith.addf %80, %79 : vector<2x32xf32>
    %82 = arith.divf %80, %81 : vector<2x32xf32>
    %83 = vector.extract_strided_slice %70 {offsets = [0, 64], sizes = [2, 32], strides = [1, 1]} : vector<2x128xf32> to vector<2x32xf32>
    %84 = math.tanh %83 : vector<2x32xf32>
    %85 = vector.extract_strided_slice %70 {offsets = [0, 96], sizes = [2, 32], strides = [1, 1]} : vector<2x128xf32> to vector<2x32xf32>
    %86 = arith.negf %85 : vector<2x32xf32>
    %87 = math.exp %86 : vector<2x32xf32>
    %cst_32 = arith.constant 1.000000e+00 : f32
    %88 = vector.broadcast %cst_32 : f32 to vector<2x32xf32>
    %89 = arith.addf %88, %87 : vector<2x32xf32>
    %90 = arith.divf %88, %89 : vector<2x32xf32>
    %91 = arith.mulf %82, %64 : vector<2x32xf32>
    %92 = arith.mulf %76, %84 : vector<2x32xf32>
    %93 = arith.addf %91, %92 : vector<2x32xf32>
    %94 = math.tanh %93 : vector<2x32xf32>
    %95 = arith.mulf %90, %94 : vector<2x32xf32>
    %c4_33 = arith.constant 4 : index
    %c0_34 = arith.constant 0 : index
    %96 = vector.load %arg12[%c4_33, %c0_34] : memref<16x32xf32, #tpu.memory_space<vmem>>, vector<2x32xf32>
    tpu.vector_store %arg12[%c4_33, %c0_34], %95 {strides = array<i32>} : memref<16x32xf32, #tpu.memory_space<vmem>>, vector<2x32xf32>,
    %c6 = arith.constant 6 : index
    %c0_35 = arith.constant 0 : index
    %97 = vector.load %arg11[%c6, %c0_35] : memref<16x128xf32, #tpu.memory_space<vmem>>, vector<2x128xf32>
    %cst_36 = arith.constant dense<0.000000e+00> : vector<2x128xf32>
    %98 = tpu.matmul %95, %7, %cst_36 {dimension_numbers = #tpu.dot_dimension_numbers<[1], [0], [0], [1], [0, 0, 1, 1], [], []>} : vector<2x32xf32>, vector<32x128xf32>, vector<2x128xf32> -> vector<2x128xf32>
    %99 = arith.addf %97, %98 : vector<2x128xf32>
    %100 = vector.extract_strided_slice %99 {offsets = [0, 0], sizes = [2, 32], strides = [1, 1]} : vector<2x128xf32> to vector<2x32xf32>
    %101 = arith.negf %100 : vector<2x32xf32>
    %102 = math.exp %101 : vector<2x32xf32>
    %cst_37 = arith.constant 1.000000e+00 : f32
    %103 = vector.broadcast %cst_37 : f32 to vector<2x32xf32>
    %104 = arith.addf %103, %102 : vector<2x32xf32>
    %105 = arith.divf %103, %104 : vector<2x32xf32>
    %106 = vector.extract_strided_slice %99 {offsets = [0, 32], sizes = [2, 32], strides = [1, 1]} : vector<2x128xf32> to vector<2x32xf32>
    %107 = arith.negf %106 : vector<2x32xf32>
    %108 = math.exp %107 : vector<2x32xf32>
    %cst_38 = arith.constant 1.000000e+00 : f32
    %109 = vector.broadcast %cst_38 : f32 to vector<2x32xf32>
    %110 = arith.addf %109, %108 : vector<2x32xf32>
    %111 = arith.divf %109, %110 : vector<2x32xf32>
    %112 = vector.extract_strided_slice %99 {offsets = [0, 64], sizes = [2, 32], strides = [1, 1]} : vector<2x128xf32> to vector<2x32xf32>
    %113 = math.tanh %112 : vector<2x32xf32>
    %114 = vector.extract_strided_slice %99 {offsets = [0, 96], sizes = [2, 32], strides = [1, 1]} : vector<2x128xf32> to vector<2x32xf32>
    %115 = arith.negf %114 : vector<2x32xf32>
    %116 = math.exp %115 : vector<2x32xf32>
    %cst_39 = arith.constant 1.000000e+00 : f32
    %117 = vector.broadcast %cst_39 : f32 to vector<2x32xf32>
    %118 = arith.addf %117, %116 : vector<2x32xf32>
    %119 = arith.divf %117, %118 : vector<2x32xf32>
    %120 = arith.mulf %111, %93 : vector<2x32xf32>
    %121 = arith.mulf %105, %113 : vector<2x32xf32>
    %122 = arith.addf %120, %121 : vector<2x32xf32>
    %123 = math.tanh %122 : vector<2x32xf32>
    %124 = arith.mulf %119, %123 : vector<2x32xf32>
    %c6_40 = arith.constant 6 : index
    %c0_41 = arith.constant 0 : index
    %125 = vector.load %arg12[%c6_40, %c0_41] : memref<16x32xf32, #tpu.memory_space<vmem>>, vector<2x32xf32>
    tpu.vector_store %arg12[%c6_40, %c0_41], %124 {strides = array<i32>} : memref<16x32xf32, #tpu.memory_space<vmem>>, vector<2x32xf32>,
    %c8 = arith.constant 8 : index
    %c0_42 = arith.constant 0 : index
    %126 = vector.load %arg11[%c8, %c0_42] : memref<16x128xf32, #tpu.memory_space<vmem>>, vector<2x128xf32>
    %cst_43 = arith.constant dense<0.000000e+00> : vector<2x128xf32>
    %127 = tpu.matmul %124, %7, %cst_43 {dimension_numbers = #tpu.dot_dimension_numbers<[1], [0], [0], [1], [0, 0, 1, 1], [], []>} : vector<2x32xf32>, vector<32x128xf32>, vector<2x128xf32> -> vector<2x128xf32>
    %128 = arith.addf %126, %127 : vector<2x128xf32>
    %129 = vector.extract_strided_slice %128 {offsets = [0, 0], sizes = [2, 32], strides = [1, 1]} : vector<2x128xf32> to vector<2x32xf32>
    %130 = arith.negf %129 : vector<2x32xf32>
    %131 = math.exp %130 : vector<2x32xf32>
    %cst_44 = arith.constant 1.000000e+00 : f32
    %132 = vector.broadcast %cst_44 : f32 to vector<2x32xf32>
    %133 = arith.addf %132, %131 : vector<2x32xf32>
    %134 = arith.divf %132, %133 : vector<2x32xf32>
    %135 = vector.extract_strided_slice %128 {offsets = [0, 32], sizes = [2, 32], strides = [1, 1]} : vector<2x128xf32> to vector<2x32xf32>
    %136 = arith.negf %135 : vector<2x32xf32>
    %137 = math.exp %136 : vector<2x32xf32>
    %cst_45 = arith.constant 1.000000e+00 : f32
    %138 = vector.broadcast %cst_45 : f32 to vector<2x32xf32>
    %139 = arith.addf %138, %137 : vector<2x32xf32>
    %140 = arith.divf %138, %139 : vector<2x32xf32>
    %141 = vector.extract_strided_slice %128 {offsets = [0, 64], sizes = [2, 32], strides = [1, 1]} : vector<2x128xf32> to vector<2x32xf32>
    %142 = math.tanh %141 : vector<2x32xf32>
    %143 = vector.extract_strided_slice %128 {offsets = [0, 96], sizes = [2, 32], strides = [1, 1]} : vector<2x128xf32> to vector<2x32xf32>
    %144 = arith.negf %143 : vector<2x32xf32>
    %145 = math.exp %144 : vector<2x32xf32>
    %cst_46 = arith.constant 1.000000e+00 : f32
    %146 = vector.broadcast %cst_46 : f32 to vector<2x32xf32>
    %147 = arith.addf %146, %145 : vector<2x32xf32>
    %148 = arith.divf %146, %147 : vector<2x32xf32>
    %149 = arith.mulf %140, %122 : vector<2x32xf32>
    %150 = arith.mulf %134, %142 : vector<2x32xf32>
    %151 = arith.addf %149, %150 : vector<2x32xf32>
    %152 = math.tanh %151 : vector<2x32xf32>
    %153 = arith.mulf %148, %152 : vector<2x32xf32>
    %c8_47 = arith.constant 8 : index
    %c0_48 = arith.constant 0 : index
    %154 = vector.load %arg12[%c8_47, %c0_48] : memref<16x32xf32, #tpu.memory_space<vmem>>, vector<2x32xf32>
    tpu.vector_store %arg12[%c8_47, %c0_48], %153 {strides = array<i32>} : memref<16x32xf32, #tpu.memory_space<vmem>>, vector<2x32xf32>,
    %c10 = arith.constant 10 : index
    %c0_49 = arith.constant 0 : index
    %155 = vector.load %arg11[%c10, %c0_49] : memref<16x128xf32, #tpu.memory_space<vmem>>, vector<2x128xf32>
    %cst_50 = arith.constant dense<0.000000e+00> : vector<2x128xf32>
    %156 = tpu.matmul %153, %7, %cst_50 {dimension_numbers = #tpu.dot_dimension_numbers<[1], [0], [0], [1], [0, 0, 1, 1], [], []>} : vector<2x32xf32>, vector<32x128xf32>, vector<2x128xf32> -> vector<2x128xf32>
    %157 = arith.addf %155, %156 : vector<2x128xf32>
    %158 = vector.extract_strided_slice %157 {offsets = [0, 0], sizes = [2, 32], strides = [1, 1]} : vector<2x128xf32> to vector<2x32xf32>
    %159 = arith.negf %158 : vector<2x32xf32>
    %160 = math.exp %159 : vector<2x32xf32>
    %cst_51 = arith.constant 1.000000e+00 : f32
    %161 = vector.broadcast %cst_51 : f32 to vector<2x32xf32>
    %162 = arith.addf %161, %160 : vector<2x32xf32>
    %163 = arith.divf %161, %162 : vector<2x32xf32>
    %164 = vector.extract_strided_slice %157 {offsets = [0, 32], sizes = [2, 32], strides = [1, 1]} : vector<2x128xf32> to vector<2x32xf32>
    %165 = arith.negf %164 : vector<2x32xf32>
    %166 = math.exp %165 : vector<2x32xf32>
    %cst_52 = arith.constant 1.000000e+00 : f32
    %167 = vector.broadcast %cst_52 : f32 to vector<2x32xf32>
    %168 = arith.addf %167, %166 : vector<2x32xf32>
    %169 = arith.divf %167, %168 : vector<2x32xf32>
    %170 = vector.extract_strided_slice %157 {offsets = [0, 64], sizes = [2, 32], strides = [1, 1]} : vector<2x128xf32> to vector<2x32xf32>
    %171 = math.tanh %170 : vector<2x32xf32>
    %172 = vector.extract_strided_slice %157 {offsets = [0, 96], sizes = [2, 32], strides = [1, 1]} : vector<2x128xf32> to vector<2x32xf32>
    %173 = arith.negf %172 : vector<2x32xf32>
    %174 = math.exp %173 : vector<2x32xf32>
    %cst_53 = arith.constant 1.000000e+00 : f32
    %175 = vector.broadcast %cst_53 : f32 to vector<2x32xf32>
    %176 = arith.addf %175, %174 : vector<2x32xf32>
    %177 = arith.divf %175, %176 : vector<2x32xf32>
    %178 = arith.mulf %169, %151 : vector<2x32xf32>
    %179 = arith.mulf %163, %171 : vector<2x32xf32>
    %180 = arith.addf %178, %179 : vector<2x32xf32>
    %181 = math.tanh %180 : vector<2x32xf32>
    %182 = arith.mulf %177, %181 : vector<2x32xf32>
    %c10_54 = arith.constant 10 : index
    %c0_55 = arith.constant 0 : index
    %183 = vector.load %arg12[%c10_54, %c0_55] : memref<16x32xf32, #tpu.memory_space<vmem>>, vector<2x32xf32>
    tpu.vector_store %arg12[%c10_54, %c0_55], %182 {strides = array<i32>} : memref<16x32xf32, #tpu.memory_space<vmem>>, vector<2x32xf32>,
    %c12 = arith.constant 12 : index
    %c0_56 = arith.constant 0 : index
    %184 = vector.load %arg11[%c12, %c0_56] : memref<16x128xf32, #tpu.memory_space<vmem>>, vector<2x128xf32>
    %cst_57 = arith.constant dense<0.000000e+00> : vector<2x128xf32>
    %185 = tpu.matmul %182, %7, %cst_57 {dimension_numbers = #tpu.dot_dimension_numbers<[1], [0], [0], [1], [0, 0, 1, 1], [], []>} : vector<2x32xf32>, vector<32x128xf32>, vector<2x128xf32> -> vector<2x128xf32>
    %186 = arith.addf %184, %185 : vector<2x128xf32>
    %187 = vector.extract_strided_slice %186 {offsets = [0, 0], sizes = [2, 32], strides = [1, 1]} : vector<2x128xf32> to vector<2x32xf32>
    %188 = arith.negf %187 : vector<2x32xf32>
    %189 = math.exp %188 : vector<2x32xf32>
    %cst_58 = arith.constant 1.000000e+00 : f32
    %190 = vector.broadcast %cst_58 : f32 to vector<2x32xf32>
    %191 = arith.addf %190, %189 : vector<2x32xf32>
    %192 = arith.divf %190, %191 : vector<2x32xf32>
    %193 = vector.extract_strided_slice %186 {offsets = [0, 32], sizes = [2, 32], strides = [1, 1]} : vector<2x128xf32> to vector<2x32xf32>
    %194 = arith.negf %193 : vector<2x32xf32>
    %195 = math.exp %194 : vector<2x32xf32>
    %cst_59 = arith.constant 1.000000e+00 : f32
    %196 = vector.broadcast %cst_59 : f32 to vector<2x32xf32>
    %197 = arith.addf %196, %195 : vector<2x32xf32>
    %198 = arith.divf %196, %197 : vector<2x32xf32>
    %199 = vector.extract_strided_slice %186 {offsets = [0, 64], sizes = [2, 32], strides = [1, 1]} : vector<2x128xf32> to vector<2x32xf32>
    %200 = math.tanh %199 : vector<2x32xf32>
    %201 = vector.extract_strided_slice %186 {offsets = [0, 96], sizes = [2, 32], strides = [1, 1]} : vector<2x128xf32> to vector<2x32xf32>
    %202 = arith.negf %201 : vector<2x32xf32>
    %203 = math.exp %202 : vector<2x32xf32>
    %cst_60 = arith.constant 1.000000e+00 : f32
    %204 = vector.broadcast %cst_60 : f32 to vector<2x32xf32>
    %205 = arith.addf %204, %203 : vector<2x32xf32>
    %206 = arith.divf %204, %205 : vector<2x32xf32>
    %207 = arith.mulf %198, %180 : vector<2x32xf32>
    %208 = arith.mulf %192, %200 : vector<2x32xf32>
    %209 = arith.addf %207, %208 : vector<2x32xf32>
    %210 = math.tanh %209 : vector<2x32xf32>
    %211 = arith.mulf %206, %210 : vector<2x32xf32>
    %c12_61 = arith.constant 12 : index
    %c0_62 = arith.constant 0 : index
    %212 = vector.load %arg12[%c12_61, %c0_62] : memref<16x32xf32, #tpu.memory_space<vmem>>, vector<2x32xf32>
    tpu.vector_store %arg12[%c12_61, %c0_62], %211 {strides = array<i32>} : memref<16x32xf32, #tpu.memory_space<vmem>>, vector<2x32xf32>,
    %c14 = arith.constant 14 : index
    %c0_63 = arith.constant 0 : index
    %213 = vector.load %arg11[%c14, %c0_63] : memref<16x128xf32, #tpu.memory_space<vmem>>, vector<2x128xf32>
    %cst_64 = arith.constant dense<0.000000e+00> : vector<2x128xf32>
    %214 = tpu.matmul %211, %7, %cst_64 {dimension_numbers = #tpu.dot_dimension_numbers<[1], [0], [0], [1], [0, 0, 1, 1], [], []>} : vector<2x32xf32>, vector<32x128xf32>, vector<2x128xf32> -> vector<2x128xf32>
    %215 = arith.addf %213, %214 : vector<2x128xf32>
    %216 = vector.extract_strided_slice %215 {offsets = [0, 0], sizes = [2, 32], strides = [1, 1]} : vector<2x128xf32> to vector<2x32xf32>
    %217 = arith.negf %216 : vector<2x32xf32>
    %218 = math.exp %217 : vector<2x32xf32>
    %cst_65 = arith.constant 1.000000e+00 : f32
    %219 = vector.broadcast %cst_65 : f32 to vector<2x32xf32>
    %220 = arith.addf %219, %218 : vector<2x32xf32>
    %221 = arith.divf %219, %220 : vector<2x32xf32>
    %222 = vector.extract_strided_slice %215 {offsets = [0, 32], sizes = [2, 32], strides = [1, 1]} : vector<2x128xf32> to vector<2x32xf32>
    %223 = arith.negf %222 : vector<2x32xf32>
    %224 = math.exp %223 : vector<2x32xf32>
    %cst_66 = arith.constant 1.000000e+00 : f32
    %225 = vector.broadcast %cst_66 : f32 to vector<2x32xf32>
    %226 = arith.addf %225, %224 : vector<2x32xf32>
    %227 = arith.divf %225, %226 : vector<2x32xf32>
    %228 = vector.extract_strided_slice %215 {offsets = [0, 64], sizes = [2, 32], strides = [1, 1]} : vector<2x128xf32> to vector<2x32xf32>
    %229 = math.tanh %228 : vector<2x32xf32>
    %230 = vector.extract_strided_slice %215 {offsets = [0, 96], sizes = [2, 32], strides = [1, 1]} : vector<2x128xf32> to vector<2x32xf32>
    %231 = arith.negf %230 : vector<2x32xf32>
    %232 = math.exp %231 : vector<2x32xf32>
    %cst_67 = arith.constant 1.000000e+00 : f32
    %233 = vector.broadcast %cst_67 : f32 to vector<2x32xf32>
    %234 = arith.addf %233, %232 : vector<2x32xf32>
    %235 = arith.divf %233, %234 : vector<2x32xf32>
    %236 = arith.mulf %227, %209 : vector<2x32xf32>
    %237 = arith.mulf %221, %229 : vector<2x32xf32>
    %238 = arith.addf %236, %237 : vector<2x32xf32>
    %239 = math.tanh %238 : vector<2x32xf32>
    %240 = arith.mulf %235, %239 : vector<2x32xf32>
    %c14_68 = arith.constant 14 : index
    %c0_69 = arith.constant 0 : index
    %241 = vector.load %arg12[%c14_68, %c0_69] : memref<16x32xf32, #tpu.memory_space<vmem>>, vector<2x32xf32>
    tpu.vector_store %arg12[%c14_68, %c0_69], %240 {strides = array<i32>} : memref<16x32xf32, #tpu.memory_space<vmem>>, vector<2x32xf32>,
    %c0_70 = arith.constant 0 : index
    %c0_71 = arith.constant 0 : index
    %242 = vector.load %arg9[%c0_70, %c0_71] : memref<2x32xf32, #tpu.memory_space<vmem>>, vector<2x32xf32>
    tpu.vector_store %arg9[%c0_70, %c0_71], %240 {strides = array<i32>} : memref<2x32xf32, #tpu.memory_space<vmem>>, vector<2x32xf32>,
    %c0_72 = arith.constant 0 : index
    %c0_73 = arith.constant 0 : index
    %243 = vector.load %arg10[%c0_72, %c0_73] : memref<2x32xf32, #tpu.memory_space<vmem>>, vector<2x32xf32>
    tpu.vector_store %arg10[%c0_72, %c0_73], %238 {strides = array<i32>} : memref<2x32xf32, #tpu.memory_space<vmem>>, vector<2x32xf32>,
    %c0_74 = arith.constant 0 : index
    %c0_75 = arith.constant 0 : index
    %244 = vector.load %arg12[%c0_74, %c0_75] : memref<16x32xf32, #tpu.memory_space<vmem>>, vector<16x32xf32>
    %c0_76 = arith.constant 0 : index
    %c0_77 = arith.constant 0 : index
    %245 = vector.load %arg4[%c0_76, %c0_77] : memref<32x10xf32, #tpu.memory_space<vmem>>, vector<32x10xf32>
    %cst_78 = arith.constant dense<0.000000e+00> : vector<16x10xf32>
    %246 = tpu.matmul %244, %245, %cst_78 {dimension_numbers = #tpu.dot_dimension_numbers<[1], [0], [0], [1], [0, 0, 1, 1], [], []>} : vector<16x32xf32>, vector<32x10xf32>, vector<16x10xf32> -> vector<16x10xf32>
    %c0_79 = arith.constant 0 : index
    %c0_80 = arith.constant 0 : index
    %247 = vector.load %arg5[%c0_79, %c0_80] : memref<1x10xf32, #tpu.memory_space<vmem>>, vector<1x10xf32>
    %248 = vector.broadcast %247 : vector<1x10xf32> to vector<16x10xf32>
    %249 = arith.addf %246, %248 : vector<16x10xf32>
    %c0_81 = arith.constant 0 : index
    %c0_82 = arith.constant 0 : index
    %250 = vector.load %arg8[%c0_81, %c0_82] : memref<16x10xf32, #tpu.memory_space<vmem>>, vector<16x10xf32>
    tpu.vector_store %arg8[%c0_81, %c0_82], %249 {strides = array<i32>} : memref<16x10xf32, #tpu.memory_space<vmem>>, vector<16x10xf32>,
    return
  }
}

</mosaic_0001>

<llo_original>
// kernel: tpu_custom_call.1
$region0: #{tpu_custom_call.1}
  #allocation0 [shape = 'u32[]', space=smem, size = 0x4, offset = 0x4, fixed_abs, tag = 'smem constant byte address 0x4 - core index']
  #allocation1 [shape = 'u32[144,128]{1,0:T(1,128)}', space=vmem, size = 0x12000, scoped, tag = 'internal scratch']
  #allocation2 [shape = 'f32[16,128]{1,0:T(8,128)}', space=vmem, size = 0x2000, scoped, tag = 'scratch operand']
  #allocation3 [shape = 'f32[16,32]{1,0:T(8,128)}', space=vmem, size = 0x2000, scoped, tag = 'scratch operand']
  %s0 = inlined_call_operand.vmem [shape: f32[16,16], index: 0, kind: input, shape index: {}]
  %s1 = inlined_call_operand.hbm [shape: f32[16,128], index: 1, kind: input, shape index: {}]
  %s2 = inlined_call_operand.vmem [shape: f32[32,128], index: 2, kind: input, shape index: {}]
  %s3 = inlined_call_operand.vmem [shape: f32[1,128], index: 3, kind: input, shape index: {}]
  %s4 = inlined_call_operand.vmem [shape: f32[32,10], index: 4, kind: input, shape index: {}]
  %s5 = inlined_call_operand.vmem [shape: f32[1,10], index: 5, kind: input, shape index: {}]
  %s6 = inlined_call_operand.vmem [shape: f32[2,32], index: 6, kind: input, shape index: {}]
  %s7 = inlined_call_operand.vmem [shape: f32[2,32], index: 7, kind: input, shape index: {}]
  %s8 = inlined_call_operand.hbm [shape: f32[16,10], index: 8, kind: output, shape index: {0}]
  %s9 = inlined_call_operand.hbm [shape: f32[2,32], index: 9, kind: output, shape index: {1}]
  %s10 = inlined_call_operand.hbm [shape: f32[2,32], index: 10, kind: output, shape index: {2}]
  %11 = xla_tuple %s8, %s9, %s10
  %s12 = sld [smem:[#allocation0]]
  $region62: #{tpu_custom_call.1} parent=0
    _
  %s14 = ssub.s32 1, %s12
  %s15 = scalar_select 0, %s14, %s12
  $region1: #{tpu_custom_call.1} parent=0
    #allocation4 [shape = 'u8[8192]{0}', space=vmem, size = 0x2000, scoped, tag = 'input window, operand 1, single buffered']
    #allocation5 [shape = 's32[1]{0}', space=sflag, size = 0x4, scoped, tag = 'scoped memory for tpu_custom_call.1']
    #allocation6 [shape = 's32[1]{0}', space=sflag, size = 0x4, scoped, tag = 'scoped memory for tpu_custom_call.1']
    #allocation7 [shape = 'u8[8192]{0}', space=vmem, size = 0x2000, scoped, tag = 'output window, operand 0, single buffered']
    #allocation8 [shape = 'u8[1024]{0}', space=vmem, size = 0x400, scoped, tag = 'output window, operand 1, single buffered']
    #allocation9 [shape = 's32[1]{0}', space=sflag, size = 0x4, scoped, tag = 'scoped memory for tpu_custom_call.1']
    #allocation10 [shape = 'u8[1024]{0}', space=vmem, size = 0x400, scoped, tag = 'output window, operand 2, single buffered']
    %16 = vsyncpa [#allocation5], 0
    %17 = vsyncpa [#allocation6], 0
    %18 = vsyncpa [#allocation9], 0
    // Predicated region
    $region2: #{tpu_custom_call.1} parent=1 // pred_check
      _
    $region3: #{tpu_custom_call.1} parent=1 // pred_check_branch
      %20 = sbr.rel (0) target = $region5
    $region4: #{tpu_custom_call.1} parent=1 // pred_region
      _
    $region5: #{tpu_custom_call.1} parent=1 // pred_fallthru
      _
    // Predicated region
    $region6: #{tpu_custom_call.1} parent=1 // pred_check
      _
    $region7: #{tpu_custom_call.1} parent=1 // pred_check_branch
      %22 = sbr.rel (0) target = $region9
    $region8: #{tpu_custom_call.1} parent=1 // pred_region
      %s24 = ssub.s32 256, 256
      %25 = vsyncadd [#allocation5], %s24
      %s26 = sshll.u32 [#allocation4], 4
      %s27 = int_to_ptr.vmem [resolvable:$true] %s26
      %32 = dma.hbm_to_vmem [thread:$0]  %s1, 256, %s27, [#allocation5], 128, 128, 8
    $region9: #{tpu_custom_call.1} parent=1 // pred_fallthru
      _
    // Predicated region
    $region10: #{tpu_custom_call.1} parent=1 // pred_check
      _
    $region11: #{tpu_custom_call.1} parent=1 // pred_check_branch
      %34 = sbr.rel (0) target = $region13
    $region12: #{tpu_custom_call.1} parent=1 // pred_region
      _
    $region13: #{tpu_custom_call.1} parent=1 // pred_fallthru
      _
    // Predicated region
    $region14: #{tpu_custom_call.1} parent=1 // pred_check
      _
    $region15: #{tpu_custom_call.1} parent=1 // pred_check_branch
      %36 = sbr.rel (0) target = $region17
    $region16: #{tpu_custom_call.1} parent=1 // pred_region
      _
    $region17: #{tpu_custom_call.1} parent=1 // pred_fallthru
      _
    // Predicated region
    $region18: #{tpu_custom_call.1} parent=1 // pred_check
      _
    $region19: #{tpu_custom_call.1} parent=1 // pred_check_branch
      %38 = sbr.rel (0) target = $region21
    $region20: #{tpu_custom_call.1} parent=1 // pred_region
      _
    $region21: #{tpu_custom_call.1} parent=1 // pred_fallthru
      _
    // Predicated region
    $region22: #{tpu_custom_call.1} parent=1 // pred_check
      _
    $region23: #{tpu_custom_call.1} parent=1 // pred_check_branch
      %40 = sbr.rel (0) target = $region25
    $region24: #{tpu_custom_call.1} parent=1 // pred_region
      _
    $region25: #{tpu_custom_call.1} parent=1 // pred_fallthru
      _
    // Predicated region
    $region26: #{tpu_custom_call.1} parent=1 // pred_check
      _
    $region27: #{tpu_custom_call.1} parent=1 // pred_check_branch
      %42 = sbr.rel (0) target = $region29
    $region28: #{tpu_custom_call.1} parent=1 // pred_region
      _
    $region29: #{tpu_custom_call.1} parent=1 // pred_fallthru
      _
    // Predicated region
    $region30: #{tpu_custom_call.1} parent=1 // pred_check
      _
    $region31: #{tpu_custom_call.1} parent=1 // pred_check_branch
      %44 = sbr.rel (0) target = $region33
    $region32: #{tpu_custom_call.1} parent=1 // pred_region
      _
    $region33: #{tpu_custom_call.1} parent=1 // pred_fallthru
      _
    // Predicated region
    $region34: #{tpu_custom_call.1} parent=1 // pred_check
      _
    $region35: #{tpu_custom_call.1} parent=1 // pred_check_branch
      %46 = sbr.rel (0) target = $region37
    $region36: #{tpu_custom_call.1} parent=1 // pred_region
      %47 = dma.done [#allocation5], 256
    $region37: #{tpu_custom_call.1} parent=1 // pred_fallthru
      _
    %v48 = vld [vmem:[%s0] sm:$0xff]
    %v49 = vld [vmem:[%s0 + $0x8] sm:$0xff]
    %v50 = vld [vmem:[#allocation4] sm:$0xff]
    %v51 = vld [vmem:[#allocation4 + $0x8] sm:$0xff]
    %v52 = vld [vmem:[%s3] sm:$0x1]
    %v54 = vlaneseq
    %v55 = vshrl.u32 %v54, 7
    %v56 = vsub.s32 0, %v55
    %v57 = vrot.slane %v52, %v56
    %vm59 = vcmask 130048
    %v61 = vsel %vm59, %v48, 0
    %v64 = vsel %vm59, %v49, 0
    %66 = vmatprep.subr.mxu0 0.0
    %67 = vmatpush1.msra.mxu0 0.0
    %68 = vmatprep.subr.mxu0 0.0
    %69 = vmatpush1.msra.mxu0 0.0
    %70 = vmatprep.subr.mxu0 0.0
    %71 = vmatpush1.msra.mxu0 0.0
    %72 = vmatprep.subr.mxu0 0.0
    %73 = vmatpush1.msra.mxu0 0.0
    %74 = vmatprep.subr.mxu0 0.0
    %75 = vmatpush1.msra.mxu0 0.0
    %76 = vmatprep.subr.mxu0 0.0
    %77 = vmatpush1.msra.mxu0 0.0
    %78 = vmatprep.subr.mxu0 0.0
    %79 = vmatpush1.msra.mxu0 0.0
    %80 = vmatprep.subr.mxu0 0.0
    %81 = vmatpush1.msra.mxu0 0.0
    %82 = vmatprep.subr.mxu0 0.0
    %83 = vmatpush1.msra.mxu0 0.0
    %84 = vmatprep.subr.mxu0 0.0
    %85 = vmatpush1.msra.mxu0 0.0
    %86 = vmatprep.subr.mxu0 0.0
    %87 = vmatpush1.msra.mxu0 0.0
    %88 = vmatprep.subr.mxu0 0.0
    %89 = vmatpush1.msra.mxu0 0.0
    %90 = vmatprep.subr.mxu0 0.0
    %91 = vmatpush1.msra.mxu0 0.0
    %92 = vmatprep.subr.mxu0 0.0
    %93 = vmatpush1.msra.mxu0 0.0
    %94 = vmatprep.subr.mxu0 0.0
    %95 = vmatpush1.msra.mxu0 %v51
    %96 = vmatprep.subr.mxu0 0.0
    %97 = vmatpush1.msra.mxu0 %v50
    %98 = vmatprep.subr.mxu0 0.0
    %99 = vmatpush2.msra.mxu0 0.0
    %100 = vmatprep.subr.mxu0 0.0
    %101 = vmatpush2.msra.mxu0 0.0
    %102 = vmatprep.subr.mxu0 0.0
    %103 = vmatpush2.msra.mxu0 0.0
    %104 = vmatprep.subr.mxu0 0.0
    %105 = vmatpush2.msra.mxu0 0.0
    %106 = vmatprep.subr.mxu0 0.0
    %107 = vmatpush2.msra.mxu0 0.0
    %108 = vmatprep.subr.mxu0 0.0
    %109 = vmatpush2.msra.mxu0 0.0
    %110 = vmatprep.subr.mxu0 0.0
    %111 = vmatpush2.msra.mxu0 0.0
    %112 = vmatprep.subr.mxu0 0.0
    %113 = vmatpush2.msra.mxu0 0.0
    %114 = vmatprep.subr.mxu0 0.0
    %115 = vmatpush2.msra.mxu0 0.0
    %116 = vmatprep.subr.mxu0 0.0
    %117 = vmatpush2.msra.mxu0 0.0
    %118 = vmatprep.subr.mxu0 0.0
    %119 = vmatpush2.msra.mxu0 0.0
    %120 = vmatprep.subr.mxu0 0.0
    %121 = vmatpush2.msra.mxu0 0.0
    %122 = vmatprep.subr.mxu0 0.0
    %123 = vmatpush2.msra.mxu0 0.0
    %124 = vmatprep.subr.mxu0 0.0
    %125 = vmatpush2.msra.mxu0 0.0
    %126 = vmatprep.subr.mxu0 0.0
    %127 = vmatpush2.msra.mxu0 0.0
    %128 = vmatprep.subr.mxu0 0.0
    %129 = vmatpush2.msra.mxu0 0.0
    %130 = vmatprep.mubr.f32.mxu0 0.0
    %131 = vmatmul.mubr.f32.gmra.mxu0 %v61
    %v132 = vpop.f32.mrf.mxu0
    %v133 = vadd.f32 %v57, %v132
    %v134 = vpop.f32.mrf.mxu0
    %135 = vmatprep.mubr.f32.mxu0 0.0
    %136 = vmatmul.mubr.f32.gmra.mxu0 %v64
    %v137 = vpop.f32.mrf.mxu0
    %v138 = vadd.f32 %v57, %v137
    %v139 = vpop.f32.mrf.mxu0
    %140 = vdwg.mxu0
    %141 = vst [vmem:[#allocation2] sm:$0xff] %v133
    %142 = vst [vmem:[#allocation2 + $0x8] sm:$0xff] %v138
    %v143 = vld [vmem:[%s2] sm:$0xff]
    %v144 = vld [vmem:[%s2 + $0x8] sm:$0xff]
    %v145 = vld [vmem:[%s2 + $0x10] sm:$0xff]
    %v146 = vld [vmem:[%s2 + $0x18] sm:$0xff]
    %v147 = vld [vmem:[%s6] sm:$0x3]
    %v148 = vld [vmem:[%s7] sm:$0x3]
    %v149 = vld [vmem:[#allocation2] sm:$0x3]
    %vm150 = vcmask 261120
    %v152 = vsel %vm150, %v147, 0
    %154 = vmatprep.subr.mxu0 0.0
    %155 = vmatpush1.msra.mxu0 0.0
    %156 = vmatprep.subr.mxu0 0.0
    %157 = vmatpush1.msra.mxu0 0.0
    %158 = vmatprep.subr.mxu0 0.0
    %159 = vmatpush1.msra.mxu0 0.0
    %160 = vmatprep.subr.mxu0 0.0
    %161 = vmatpush1.msra.mxu0 0.0
    %162 = vmatprep.subr.mxu0 0.0
    %163 = vmatpush1.msra.mxu0 0.0
    %164 = vmatprep.subr.mxu0 0.0
    %165 = vmatpush1.msra.mxu0 0.0
    %166 = vmatprep.subr.mxu0 0.0
    %167 = vmatpush1.msra.mxu0 0.0
    %168 = vmatprep.subr.mxu0 0.0
    %169 = vmatpush1.msra.mxu0 0.0
    %170 = vmatprep.subr.mxu0 0.0
    %171 = vmatpush1.msra.mxu0 0.0
    %172 = vmatprep.subr.mxu0 0.0
    %173 = vmatpush1.msra.mxu0 0.0
    %174 = vmatprep.subr.mxu0 0.0
    %175 = vmatpush1.msra.mxu0 0.0
    %176 = vmatprep.subr.mxu0 0.0
    %177 = vmatpush1.msra.mxu0 0.0
    %178 = vmatprep.subr.mxu0 0.0
    %179 = vmatpush1.msra.mxu0 %v146
    %180 = vmatprep.subr.mxu0 0.0
    %181 = vmatpush1.msra.mxu0 %v145
    %182 = vmatprep.subr.mxu0 0.0
    %183 = vmatpush1.msra.mxu0 %v144
    %184 = vmatprep.subr.mxu0 0.0
    %185 = vmatpush1.msra.mxu0 %v143
    %186 = vmatprep.subr.mxu0 0.0
    %187 = vmatpush2.msra.mxu0 0.0
    %188 = vmatprep.subr.mxu0 0.0
    %189 = vmatpush2.msra.mxu0 0.0
    %190 = vmatprep.subr.mxu0 0.0
    %191 = vmatpush2.msra.mxu0 0.0
    %192 = vmatprep.subr.mxu0 0.0
    %193 = vmatpush2.msra.mxu0 0.0
    %194 = vmatprep.subr.mxu0 0.0
    %195 = vmatpush2.msra.mxu0 0.0
    %196 = vmatprep.subr.mxu0 0.0
    %197 = vmatpush2.msra.mxu0 0.0
    %198 = vmatprep.subr.mxu0 0.0
    %199 = vmatpush2.msra.mxu0 0.0
    %200 = vmatprep.subr.mxu0 0.0
    %201 = vmatpush2.msra.mxu0 0.0
    %202 = vmatprep.subr.mxu0 0.0
    %203 = vmatpush2.msra.mxu0 0.0
    %204 = vmatprep.subr.mxu0 0.0
    %205 = vmatpush2.msra.mxu0 0.0
    %206 = vmatprep.subr.mxu0 0.0
    %207 = vmatpush2.msra.mxu0 0.0
    %208 = vmatprep.subr.mxu0 0.0
    %209 = vmatpush2.msra.mxu0 0.0
    %210 = vmatprep.subr.mxu0 0.0
    %211 = vmatpush2.msra.mxu0 0.0
    %212 = vmatprep.subr.mxu0 0.0
    %213 = vmatpush2.msra.mxu0 0.0
    %214 = vmatprep.subr.mxu0 0.0
    %215 = vmatpush2.msra.mxu0 0.0
    %216 = vmatprep.subr.mxu0 0.0
    %217 = vmatpush2.msra.mxu0 0.0
    %218 = vmatprep.mubr.f32.mxu0 0.0
    %219 = vmatmul.mubr.f32.gmra.mxu0 %v152
    %v220 = vpop.f32.mrf.mxu0
    %v221 = vadd.f32 0.0, %v220
    %v222 = vpop.f32.mrf.mxu0
    %223 = vdwg.mxu0
    %v224 = vadd.f32 %v149, %v221
    %v225 = vxor.u32 %v224, 2147483648
    %v226 = vmul.f32 %v225, 1.442695
    %v227 = vpow.pop %v226
    %v228 = vadd.f32 %v227, 1.0
    %v229 = vrcp.pop %v228
    %v230 = vmul.f32 1.0, %v229
    %v231 = vtanh.pop %v224
    %233 = vrot.lane.b32.xlu0 %v148, 32
    %v234 = vpop.permute.xlu0 %233
    %v236 = vmul.f32 %v230, %v234
    %238 = vrot.lane.b32.xlu0 %v231, 64
    %v239 = vpop.permute.xlu0 %238
    %v241 = vmul.f32 %v230, %v239
    %243 = vrot.lane.b32.xlu0 %v241, 32
    %v244 = vpop.permute.xlu0 %243
    %v246 = vadd.f32 %v236, %v244
    %v247 = vtanh.pop %v246
    %249 = vrot.lane.b32.xlu0 %v247, 64
    %v250 = vpop.permute.xlu0 %249
    %v252 = vmul.f32 %v230, %v250
    %254 = vrot.lane.b32.xlu0 %v252, 32
    %v255 = vpop.permute.xlu0 %254
    %vm257 = vcmask 254976
    %258 = vst.msk [vmem:[#allocation3] sm:$0x3] %vm257, %v255
    %v259 = vld [vmem:[#allocation2 + $0x2] sm:$0x3]
    %v260 = vsel %vm150, %v255, 0
    %262 = vmatprep.subr.mxu0 0.0
    %263 = vmatpush1.msra.mxu0 0.0
    %264 = vmatprep.subr.mxu0 0.0
    %265 = vmatpush1.msra.mxu0 0.0
    %266 = vmatprep.subr.mxu0 0.0
    %267 = vmatpush1.msra.mxu0 0.0
    %268 = vmatprep.subr.mxu0 0.0
    %269 = vmatpush1.msra.mxu0 0.0
    %270 = vmatprep.subr.mxu0 0.0
    %271 = vmatpush1.msra.mxu0 0.0
    %272 = vmatprep.subr.mxu0 0.0
    %273 = vmatpush1.msra.mxu0 0.0
    %274 = vmatprep.subr.mxu0 0.0
    %275 = vmatpush1.msra.mxu0 0.0
    %276 = vmatprep.subr.mxu0 0.0
    %277 = vmatpush1.msra.mxu0 0.0
    %278 = vmatprep.subr.mxu0 0.0
    %279 = vmatpush1.msra.mxu0 0.0
    %280 = vmatprep.subr.mxu0 0.0
    %281 = vmatpush1.msra.mxu0 0.0
    %282 = vmatprep.subr.mxu0 0.0
    %283 = vmatpush1.msra.mxu0 0.0
    %284 = vmatprep.subr.mxu0 0.0
    %285 = vmatpush1.msra.mxu0 0.0
    %286 = vmatprep.subr.mxu0 0.0
    %287 = vmatpush1.msra.mxu0 %v146
    %288 = vmatprep.subr.mxu0 0.0
    %289 = vmatpush1.msra.mxu0 %v145
    %290 = vmatprep.subr.mxu0 0.0
    %291 = vmatpush1.msra.mxu0 %v144
    %292 = vmatprep.subr.mxu0 0.0
    %293 = vmatpush1.msra.mxu0 %v143
    %294 = vmatprep.subr.mxu0 0.0
    %295 = vmatpush2.msra.mxu0 0.0
    %296 = vmatprep.subr.mxu0 0.0
    %297 = vmatpush2.msra.mxu0 0.0
    %298 = vmatprep.subr.mxu0 0.0
    %299 = vmatpush2.msra.mxu0 0.0
    %300 = vmatprep.subr.mxu0 0.0
    %301 = vmatpush2.msra.mxu0 0.0
    %302 = vmatprep.subr.mxu0 0.0
    %303 = vmatpush2.msra.mxu0 0.0
    %304 = vmatprep.subr.mxu0 0.0
    %305 = vmatpush2.msra.mxu0 0.0
    %306 = vmatprep.subr.mxu0 0.0
    %307 = vmatpush2.msra.mxu0 0.0
    %308 = vmatprep.subr.mxu0 0.0
    %309 = vmatpush2.msra.mxu0 0.0
    %310 = vmatprep.subr.mxu0 0.0
    %311 = vmatpush2.msra.mxu0 0.0
    %312 = vmatprep.subr.mxu0 0.0
    %313 = vmatpush2.msra.mxu0 0.0
    %314 = vmatprep.subr.mxu0 0.0
    %315 = vmatpush2.msra.mxu0 0.0
    %316 = vmatprep.subr.mxu0 0.0
    %317 = vmatpush2.msra.mxu0 0.0
    %318 = vmatprep.subr.mxu0 0.0
    %319 = vmatpush2.msra.mxu0 0.0
    %320 = vmatprep.subr.mxu0 0.0
    %321 = vmatpush2.msra.mxu0 0.0
    %322 = vmatprep.subr.mxu0 0.0
    %323 = vmatpush2.msra.mxu0 0.0
    %324 = vmatprep.subr.mxu0 0.0
    %325 = vmatpush2.msra.mxu0 0.0
    %326 = vmatprep.mubr.f32.mxu0 0.0
    %327 = vmatmul.mubr.f32.gmra.mxu0 %v260
    %v328 = vpop.f32.mrf.mxu0
    %v329 = vadd.f32 0.0, %v328
    %v330 = vpop.f32.mrf.mxu0
    %331 = vdwg.mxu0
    %v332 = vadd.f32 %v259, %v329
    %v333 = vxor.u32 %v332, 2147483648
    %v334 = vmul.f32 %v333, 1.442695
    %v335 = vpow.pop %v334
    %v336 = vadd.f32 %v335, 1.0
    %v337 = vrcp.pop %v336
    %v338 = vmul.f32 1.0, %v337
    %v339 = vtanh.pop %v332
    %v340 = vmul.f32 %v338, %v246
    %342 = vrot.lane.b32.xlu0 %v339, 64
    %v343 = vpop.permute.xlu0 %342
    %v345 = vmul.f32 %v338, %v343
    %347 = vrot.lane.b32.xlu0 %v345, 32
    %v348 = vpop.permute.xlu0 %347
    %v350 = vadd.f32 %v340, %v348
    %v351 = vtanh.pop %v350
    %353 = vrot.lane.b32.xlu0 %v351, 64
    %v354 = vpop.permute.xlu0 %353
    %v356 = vmul.f32 %v338, %v354
    %358 = vrot.lane.b32.xlu0 %v356, 32
    %v359 = vpop.permute.xlu0 %358
    %361 = vst.msk [vmem:[#allocation3 + $0x2] sm:$0x3] %vm257, %v359
    %v362 = vld [vmem:[#allocation2 + $0x4] sm:$0x3]
    %v363 = vsel %vm150, %v359, 0
    %365 = vmatprep.subr.mxu0 0.0
    %366 = vmatpush1.msra.mxu0 0.0
    %367 = vmatprep.subr.mxu0 0.0
    %368 = vmatpush1.msra.mxu0 0.0
    %369 = vmatprep.subr.mxu0 0.0
    %370 = vmatpush1.msra.mxu0 0.0
    %371 = vmatprep.subr.mxu0 0.0
    %372 = vmatpush1.msra.mxu0 0.0
    %373 = vmatprep.subr.mxu0 0.0
    %374 = vmatpush1.msra.mxu0 0.0
    %375 = vmatprep.subr.mxu0 0.0
    %376 = vmatpush1.msra.mxu0 0.0
    %377 = vmatprep.subr.mxu0 0.0
    %378 = vmatpush1.msra.mxu0 0.0
    %379 = vmatprep.subr.mxu0 0.0
    %380 = vmatpush1.msra.mxu0 0.0
    %381 = vmatprep.subr.mxu0 0.0
    %382 = vmatpush1.msra.mxu0 0.0
    %383 = vmatprep.subr.mxu0 0.0
    %384 = vmatpush1.msra.mxu0 0.0
    %385 = vmatprep.subr.mxu0 0.0
    %386 = vmatpush1.msra.mxu0 0.0
    %387 = vmatprep.subr.mxu0 0.0
    %388 = vmatpush1.msra.mxu0 0.0
    %389 = vmatprep.subr.mxu0 0.0
    %390 = vmatpush1.msra.mxu0 %v146
    %391 = vmatprep.subr.mxu0 0.0
    %392 = vmatpush1.msra.mxu0 %v145
    %393 = vmatprep.subr.mxu0 0.0
    %394 = vmatpush1.msra.mxu0 %v144
    %395 = vmatprep.subr.mxu0 0.0
    %396 = vmatpush1.msra.mxu0 %v143
    %397 = vmatprep.subr.mxu0 0.0
    %398 = vmatpush2.msra.mxu0 0.0
    %399 = vmatprep.subr.mxu0 0.0
    %400 = vmatpush2.msra.mxu0 0.0
    %401 = vmatprep.subr.mxu0 0.0
    %402 = vmatpush2.msra.mxu0 0.0
    %403 = vmatprep.subr.mxu0 0.0
    %404 = vmatpush2.msra.mxu0 0.0
    %405 = vmatprep.subr.mxu0 0.0
    %406 = vmatpush2.msra.mxu0 0.0
    %407 = vmatprep.subr.mxu0 0.0
    %408 = vmatpush2.msra.mxu0 0.0
    %409 = vmatprep.subr.mxu0 0.0
    %410 = vmatpush2.msra.mxu0 0.0
    %411 = vmatprep.subr.mxu0 0.0
    %412 = vmatpush2.msra.mxu0 0.0
    %413 = vmatprep.subr.mxu0 0.0
    %414 = vmatpush2.msra.mxu0 0.0
    %415 = vmatprep.subr.mxu0 0.0
    %416 = vmatpush2.msra.mxu0 0.0
    %417 = vmatprep.subr.mxu0 0.0
    %418 = vmatpush2.msra.mxu0 0.0
    %419 = vmatprep.subr.mxu0 0.0
    %420 = vmatpush2.msra.mxu0 0.0
    %421 = vmatprep.subr.mxu0 0.0
    %422 = vmatpush2.msra.mxu0 0.0
    %423 = vmatprep.subr.mxu0 0.0
    %424 = vmatpush2.msra.mxu0 0.0
    %425 = vmatprep.subr.mxu0 0.0
    %426 = vmatpush2.msra.mxu0 0.0
    %427 = vmatprep.subr.mxu0 0.0
    %428 = vmatpush2.msra.mxu0 0.0
    %429 = vmatprep.mubr.f32.mxu0 0.0
    %430 = vmatmul.mubr.f32.gmra.mxu0 %v363
    %v431 = vpop.f32.mrf.mxu0
    %v432 = vadd.f32 0.0, %v431
    %v433 = vpop.f32.mrf.mxu0
    %434 = vdwg.mxu0
    %v435 = vadd.f32 %v362, %v432
    %v436 = vxor.u32 %v435, 2147483648
    %v437 = vmul.f32 %v436, 1.442695
    %v438 = vpow.pop %v437
    %v439 = vadd.f32 %v438, 1.0
    %v440 = vrcp.pop %v439
    %v441 = vmul.f32 1.0, %v440
    %v442 = vtanh.pop %v435
    %v443 = vmul.f32 %v441, %v350
    %445 = vrot.lane.b32.xlu0 %v442, 64
    %v446 = vpop.permute.xlu0 %445
    %v448 = vmul.f32 %v441, %v446
    %450 = vrot.lane.b32.xlu0 %v448, 32
    %v451 = vpop.permute.xlu0 %450
    %v453 = vadd.f32 %v443, %v451
    %v454 = vtanh.pop %v453
    %456 = vrot.lane.b32.xlu0 %v454, 64
    %v457 = vpop.permute.xlu0 %456
    %v459 = vmul.f32 %v441, %v457
    %461 = vrot.lane.b32.xlu0 %v459, 32
    %v462 = vpop.permute.xlu0 %461
    %464 = vst.msk [vmem:[#allocation3 + $0x4] sm:$0x3] %vm257, %v462
    %v465 = vld [vmem:[#allocation2 + $0x6] sm:$0x3]
    %v466 = vsel %vm150, %v462, 0
    %468 = vmatprep.subr.mxu0 0.0
    %469 = vmatpush1.msra.mxu0 0.0
    %470 = vmatprep.subr.mxu0 0.0
    %471 = vmatpush1.msra.mxu0 0.0
    %472 = vmatprep.subr.mxu0 0.0
    %473 = vmatpush1.msra.mxu0 0.0
    %474 = vmatprep.subr.mxu0 0.0
    %475 = vmatpush1.msra.mxu0 0.0
    %476 = vmatprep.subr.mxu0 0.0
    %477 = vmatpush1.msra.mxu0 0.0
    %478 = vmatprep.subr.mxu0 0.0
    %479 = vmatpush1.msra.mxu0 0.0
    %480 = vmatprep.subr.mxu0 0.0
    %481 = vmatpush1.msra.mxu0 0.0
    %482 = vmatprep.subr.mxu0 0.0
    %483 = vmatpush1.msra.mxu0 0.0
    %484 = vmatprep.subr.mxu0 0.0
    %485 = vmatpush1.msra.mxu0 0.0
    %486 = vmatprep.subr.mxu0 0.0
    %487 = vmatpush1.msra.mxu0 0.0
    %488 = vmatprep.subr.mxu0 0.0
    %489 = vmatpush1.msra.mxu0 0.0
    %490 = vmatprep.subr.mxu0 0.0
    %491 = vmatpush1.msra.mxu0 0.0
    %492 = vmatprep.subr.mxu0 0.0
    %493 = vmatpush1.msra.mxu0 %v146
    %494 = vmatprep.subr.mxu0 0.0
    %495 = vmatpush1.msra.mxu0 %v145
    %496 = vmatprep.subr.mxu0 0.0
    %497 = vmatpush1.msra.mxu0 %v144
    %498 = vmatprep.subr.mxu0 0.0
    %499 = vmatpush1.msra.mxu0 %v143
    %500 = vmatprep.subr.mxu0 0.0
    %501 = vmatpush2.msra.mxu0 0.0
    %502 = vmatprep.subr.mxu0 0.0
    %503 = vmatpush2.msra.mxu0 0.0
    %504 = vmatprep.subr.mxu0 0.0
    %505 = vmatpush2.msra.mxu0 0.0
    %506 = vmatprep.subr.mxu0 0.0
    %507 = vmatpush2.msra.mxu0 0.0
    %508 = vmatprep.subr.mxu0 0.0
    %509 = vmatpush2.msra.mxu0 0.0
    %510 = vmatprep.subr.mxu0 0.0
    %511 = vmatpush2.msra.mxu0 0.0
    %512 = vmatprep.subr.mxu0 0.0
    %513 = vmatpush2.msra.mxu0 0.0
    %514 = vmatprep.subr.mxu0 0.0
    %515 = vmatpush2.msra.mxu0 0.0
    %516 = vmatprep.subr.mxu0 0.0
    %517 = vmatpush2.msra.mxu0 0.0
    %518 = vmatprep.subr.mxu0 0.0
    %519 = vmatpush2.msra.mxu0 0.0
    %520 = vmatprep.subr.mxu0 0.0
    %521 = vmatpush2.msra.mxu0 0.0
    %522 = vmatprep.subr.mxu0 0.0
    %523 = vmatpush2.msra.mxu0 0.0
    %524 = vmatprep.subr.mxu0 0.0
    %525 = vmatpush2.msra.mxu0 0.0
    %526 = vmatprep.subr.mxu0 0.0
    %527 = vmatpush2.msra.mxu0 0.0
    %528 = vmatprep.subr.mxu0 0.0
    %529 = vmatpush2.msra.mxu0 0.0
    %530 = vmatprep.subr.mxu0 0.0
    %531 = vmatpush2.msra.mxu0 0.0
    %532 = vmatprep.mubr.f32.mxu0 0.0
    %533 = vmatmul.mubr.f32.gmra.mxu0 %v466
    %v534 = vpop.f32.mrf.mxu0
    %v535 = vadd.f32 0.0, %v534
    %v536 = vpop.f32.mrf.mxu0
    %537 = vdwg.mxu0
    %v538 = vadd.f32 %v465, %v535
    %v539 = vxor.u32 %v538, 2147483648
    %v540 = vmul.f32 %v539, 1.442695
    %v541 = vpow.pop %v540
    %v542 = vadd.f32 %v541, 1.0
    %v543 = vrcp.pop %v542
    %v544 = vmul.f32 1.0, %v543
    %v545 = vtanh.pop %v538
    %v546 = vmul.f32 %v544, %v453
    %548 = vrot.lane.b32.xlu0 %v545, 64
    %v549 = vpop.permute.xlu0 %548
    %v551 = vmul.f32 %v544, %v549
    %553 = vrot.lane.b32.xlu0 %v551, 32
    %v554 = vpop.permute.xlu0 %553
    %v556 = vadd.f32 %v546, %v554
    %v557 = vtanh.pop %v556
    %559 = vrot.lane.b32.xlu0 %v557, 64
    %v560 = vpop.permute.xlu0 %559
    %v562 = vmul.f32 %v544, %v560
    %564 = vrot.lane.b32.xlu0 %v562, 32
    %v565 = vpop.permute.xlu0 %564
    %567 = vst.msk [vmem:[#allocation3 + $0x6] sm:$0x3] %vm257, %v565
    %v568 = vld [vmem:[#allocation2 + $0x8] sm:$0x3]
    %v569 = vsel %vm150, %v565, 0
    %571 = vmatprep.subr.mxu0 0.0
    %572 = vmatpush1.msra.mxu0 0.0
    %573 = vmatprep.subr.mxu0 0.0
    %574 = vmatpush1.msra.mxu0 0.0
    %575 = vmatprep.subr.mxu0 0.0
    %576 = vmatpush1.msra.mxu0 0.0
    %577 = vmatprep.subr.mxu0 0.0
    %578 = vmatpush1.msra.mxu0 0.0
    %579 = vmatprep.subr.mxu0 0.0
    %580 = vmatpush1.msra.mxu0 0.0
    %581 = vmatprep.subr.mxu0 0.0
    %582 = vmatpush1.msra.mxu0 0.0
    %583 = vmatprep.subr.mxu0 0.0
    %584 = vmatpush1.msra.mxu0 0.0
    %585 = vmatprep.subr.mxu0 0.0
    %586 = vmatpush1.msra.mxu0 0.0
    %587 = vmatprep.subr.mxu0 0.0
    %588 = vmatpush1.msra.mxu0 0.0
    %589 = vmatprep.subr.mxu0 0.0
    %590 = vmatpush1.msra.mxu0 0.0
    %591 = vmatprep.subr.mxu0 0.0
    %592 = vmatpush1.msra.mxu0 0.0
    %593 = vmatprep.subr.mxu0 0.0
    %594 = vmatpush1.msra.mxu0 0.0
    %595 = vmatprep.subr.mxu0 0.0
    %596 = vmatpush1.msra.mxu0 %v146
    %597 = vmatprep.subr.mxu0 0.0
    %598 = vmatpush1.msra.mxu0 %v145
    %599 = vmatprep.subr.mxu0 0.0
    %600 = vmatpush1.msra.mxu0 %v144
    %601 = vmatprep.subr.mxu0 0.0
    %602 = vmatpush1.msra.mxu0 %v143
    %603 = vmatprep.subr.mxu0 0.0
    %604 = vmatpush2.msra.mxu0 0.0
    %605 = vmatprep.subr.mxu0 0.0
    %606 = vmatpush2.msra.mxu0 0.0
    %607 = vmatprep.subr.mxu0 0.0
    %608 = vmatpush2.msra.mxu0 0.0
    %609 = vmatprep.subr.mxu0 0.0
    %610 = vmatpush2.msra.mxu0 0.0
    %611 = vmatprep.subr.mxu0 0.0
    %612 = vmatpush2.msra.mxu0 0.0
    %613 = vmatprep.subr.mxu0 0.0
    %614 = vmatpush2.msra.mxu0 0.0
    %615 = vmatprep.subr.mxu0 0.0
    %616 = vmatpush2.msra.mxu0 0.0
    %617 = vmatprep.subr.mxu0 0.0
    %618 = vmatpush2.msra.mxu0 0.0
    %619 = vmatprep.subr.mxu0 0.0
    %620 = vmatpush2.msra.mxu0 0.0
    %621 = vmatprep.subr.mxu0 0.0
    %622 = vmatpush2.msra.mxu0 0.0
    %623 = vmatprep.subr.mxu0 0.0
    %624 = vmatpush2.msra.mxu0 0.0
    %625 = vmatprep.subr.mxu0 0.0
    %626 = vmatpush2.msra.mxu0 0.0
    %627 = vmatprep.subr.mxu0 0.0
    %628 = vmatpush2.msra.mxu0 0.0
    %629 = vmatprep.subr.mxu0 0.0
    %630 = vmatpush2.msra.mxu0 0.0
    %631 = vmatprep.subr.mxu0 0.0
    %632 = vmatpush2.msra.mxu0 0.0
    %633 = vmatprep.subr.mxu0 0.0
    %634 = vmatpush2.msra.mxu0 0.0
    %635 = vmatprep.mubr.f32.mxu0 0.0
    %636 = vmatmul.mubr.f32.gmra.mxu0 %v569
    %v637 = vpop.f32.mrf.mxu0
    %v638 = vadd.f32 0.0, %v637
    %v639 = vpop.f32.mrf.mxu0
    %640 = vdwg.mxu0
    %v641 = vadd.f32 %v568, %v638
    %v642 = vxor.u32 %v641, 2147483648
    %v643 = vmul.f32 %v642, 1.442695
    %v644 = vpow.pop %v643
    %v645 = vadd.f32 %v644, 1.0
    %v646 = vrcp.pop %v645
    %v647 = vmul.f32 1.0, %v646
    %v648 = vtanh.pop %v641
    %v649 = vmul.f32 %v647, %v556
    %651 = vrot.lane.b32.xlu0 %v648, 64
    %v652 = vpop.permute.xlu0 %651
    %v654 = vmul.f32 %v647, %v652
    %656 = vrot.lane.b32.xlu0 %v654, 32
    %v657 = vpop.permute.xlu0 %656
    %v659 = vadd.f32 %v649, %v657
    %v660 = vtanh.pop %v659
    %662 = vrot.lane.b32.xlu0 %v660, 64
    %v663 = vpop.permute.xlu0 %662
    %v665 = vmul.f32 %v647, %v663
    %667 = vrot.lane.b32.xlu0 %v665, 32
    %v668 = vpop.permute.xlu0 %667
    %670 = vst.msk [vmem:[#allocation3 + $0x8] sm:$0x3] %vm257, %v668
    %v671 = vld [vmem:[#allocation2 + $0xa] sm:$0x3]
    %v672 = vsel %vm150, %v668, 0
    %674 = vmatprep.subr.mxu0 0.0
    %675 = vmatpush1.msra.mxu0 0.0
    %676 = vmatprep.subr.mxu0 0.0
    %677 = vmatpush1.msra.mxu0 0.0
    %678 = vmatprep.subr.mxu0 0.0
    %679 = vmatpush1.msra.mxu0 0.0
    %680 = vmatprep.subr.mxu0 0.0
    %681 = vmatpush1.msra.mxu0 0.0
    %682 = vmatprep.subr.mxu0 0.0
    %683 = vmatpush1.msra.mxu0 0.0
    %684 = vmatprep.subr.mxu0 0.0
    %685 = vmatpush1.msra.mxu0 0.0
    %686 = vmatprep.subr.mxu0 0.0
    %687 = vmatpush1.msra.mxu0 0.0
    %688 = vmatprep.subr.mxu0 0.0
    %689 = vmatpush1.msra.mxu0 0.0
    %690 = vmatprep.subr.mxu0 0.0
    %691 = vmatpush1.msra.mxu0 0.0
    %692 = vmatprep.subr.mxu0 0.0
    %693 = vmatpush1.msra.mxu0 0.0
    %694 = vmatprep.subr.mxu0 0.0
    %695 = vmatpush1.msra.mxu0 0.0
    %696 = vmatprep.subr.mxu0 0.0
    %697 = vmatpush1.msra.mxu0 0.0
    %698 = vmatprep.subr.mxu0 0.0
    %699 = vmatpush1.msra.mxu0 %v146
    %700 = vmatprep.subr.mxu0 0.0
    %701 = vmatpush1.msra.mxu0 %v145
    %702 = vmatprep.subr.mxu0 0.0
    %703 = vmatpush1.msra.mxu0 %v144
    %704 = vmatprep.subr.mxu0 0.0
    %705 = vmatpush1.msra.mxu0 %v143
    %706 = vmatprep.subr.mxu0 0.0
    %707 = vmatpush2.msra.mxu0 0.0
    %708 = vmatprep.subr.mxu0 0.0
    %709 = vmatpush2.msra.mxu0 0.0
    %710 = vmatprep.subr.mxu0 0.0
    %711 = vmatpush2.msra.mxu0 0.0
    %712 = vmatprep.subr.mxu0 0.0
    %713 = vmatpush2.msra.mxu0 0.0
    %714 = vmatprep.subr.mxu0 0.0
    %715 = vmatpush2.msra.mxu0 0.0
    %716 = vmatprep.subr.mxu0 0.0
    %717 = vmatpush2.msra.mxu0 0.0
    %718 = vmatprep.subr.mxu0 0.0
    %719 = vmatpush2.msra.mxu0 0.0
    %720 = vmatprep.subr.mxu0 0.0
    %721 = vmatpush2.msra.mxu0 0.0
    %722 = vmatprep.subr.mxu0 0.0
    %723 = vmatpush2.msra.mxu0 0.0
    %724 = vmatprep.subr.mxu0 0.0
    %725 = vmatpush2.msra.mxu0 0.0
    %726 = vmatprep.subr.mxu0 0.0
    %727 = vmatpush2.msra.mxu0 0.0
    %728 = vmatprep.subr.mxu0 0.0
    %729 = vmatpush2.msra.mxu0 0.0
    %730 = vmatprep.subr.mxu0 0.0
    %731 = vmatpush2.msra.mxu0 0.0
    %732 = vmatprep.subr.mxu0 0.0
    %733 = vmatpush2.msra.mxu0 0.0
    %734 = vmatprep.subr.mxu0 0.0
    %735 = vmatpush2.msra.mxu0 0.0
    %736 = vmatprep.subr.mxu0 0.0
    %737 = vmatpush2.msra.mxu0 0.0
    %738 = vmatprep.mubr.f32.mxu0 0.0
    %739 = vmatmul.mubr.f32.gmra.mxu0 %v672
    %v740 = vpop.f32.mrf.mxu0
    %v741 = vadd.f32 0.0, %v740
    %v742 = vpop.f32.mrf.mxu0
    %743 = vdwg.mxu0
    %v744 = vadd.f32 %v671, %v741
    %v745 = vxor.u32 %v744, 2147483648
    %v746 = vmul.f32 %v745, 1.442695
    %v747 = vpow.pop %v746
    %v748 = vadd.f32 %v747, 1.0
    %v749 = vrcp.pop %v748
    %v750 = vmul.f32 1.0, %v749
    %v751 = vtanh.pop %v744
    %v752 = vmul.f32 %v750, %v659
    %754 = vrot.lane.b32.xlu0 %v751, 64
    %v755 = vpop.permute.xlu0 %754
    %v757 = vmul.f32 %v750, %v755
    %759 = vrot.lane.b32.xlu0 %v757, 32
    %v760 = vpop.permute.xlu0 %759
    %v762 = vadd.f32 %v752, %v760
    %v763 = vtanh.pop %v762
    %765 = vrot.lane.b32.xlu0 %v763, 64
    %v766 = vpop.permute.xlu0 %765
    %v768 = vmul.f32 %v750, %v766
    %770 = vrot.lane.b32.xlu0 %v768, 32
    %v771 = vpop.permute.xlu0 %770
    %773 = vst.msk [vmem:[#allocation3 + $0xa] sm:$0x3] %vm257, %v771
    %v774 = vld [vmem:[#allocation2 + $0xc] sm:$0x3]
    %v775 = vsel %vm150, %v771, 0
    %777 = vmatprep.subr.mxu0 0.0
    %778 = vmatpush1.msra.mxu0 0.0
    %779 = vmatprep.subr.mxu0 0.0
    %780 = vmatpush1.msra.mxu0 0.0
    %781 = vmatprep.subr.mxu0 0.0
    %782 = vmatpush1.msra.mxu0 0.0
    %783 = vmatprep.subr.mxu0 0.0
    %784 = vmatpush1.msra.mxu0 0.0
    %785 = vmatprep.subr.mxu0 0.0
    %786 = vmatpush1.msra.mxu0 0.0
    %787 = vmatprep.subr.mxu0 0.0
    %788 = vmatpush1.msra.mxu0 0.0
    %789 = vmatprep.subr.mxu0 0.0
    %790 = vmatpush1.msra.mxu0 0.0
    %791 = vmatprep.subr.mxu0 0.0
    %792 = vmatpush1.msra.mxu0 0.0
    %793 = vmatprep.subr.mxu0 0.0
    %794 = vmatpush1.msra.mxu0 0.0
    %795 = vmatprep.subr.mxu0 0.0
    %796 = vmatpush1.msra.mxu0 0.0
    %797 = vmatprep.subr.mxu0 0.0
    %798 = vmatpush1.msra.mxu0 0.0
    %799 = vmatprep.subr.mxu0 0.0
    %800 = vmatpush1.msra.mxu0 0.0
    %801 = vmatprep.subr.mxu0 0.0
    %802 = vmatpush1.msra.mxu0 %v146
    %803 = vmatprep.subr.mxu0 0.0
    %804 = vmatpush1.msra.mxu0 %v145
    %805 = vmatprep.subr.mxu0 0.0
    %806 = vmatpush1.msra.mxu0 %v144
    %807 = vmatprep.subr.mxu0 0.0
    %808 = vmatpush1.msra.mxu0 %v143
    %809 = vmatprep.subr.mxu0 0.0
    %810 = vmatpush2.msra.mxu0 0.0
    %811 = vmatprep.subr.mxu0 0.0
    %812 = vmatpush2.msra.mxu0 0.0
    %813 = vmatprep.subr.mxu0 0.0
    %814 = vmatpush2.msra.mxu0 0.0
    %815 = vmatprep.subr.mxu0 0.0
    %816 = vmatpush2.msra.mxu0 0.0
    %817 = vmatprep.subr.mxu0 0.0
    %818 = vmatpush2.msra.mxu0 0.0
    %819 = vmatprep.subr.mxu0 0.0
    %820 = vmatpush2.msra.mxu0 0.0
    %821 = vmatprep.subr.mxu0 0.0
    %822 = vmatpush2.msra.mxu0 0.0
    %823 = vmatprep.subr.mxu0 0.0
    %824 = vmatpush2.msra.mxu0 0.0
    %825 = vmatprep.subr.mxu0 0.0
    %826 = vmatpush2.msra.mxu0 0.0
    %827 = vmatprep.subr.mxu0 0.0
    %828 = vmatpush2.msra.mxu0 0.0
    %829 = vmatprep.subr.mxu0 0.0
    %830 = vmatpush2.msra.mxu0 0.0
    %831 = vmatprep.subr.mxu0 0.0
    %832 = vmatpush2.msra.mxu0 0.0
    %833 = vmatprep.subr.mxu0 0.0
    %834 = vmatpush2.msra.mxu0 0.0
    %835 = vmatprep.subr.mxu0 0.0
    %836 = vmatpush2.msra.mxu0 0.0
    %837 = vmatprep.subr.mxu0 0.0
    %838 = vmatpush2.msra.mxu0 0.0
    %839 = vmatprep.subr.mxu0 0.0
    %840 = vmatpush2.msra.mxu0 0.0
    %841 = vmatprep.mubr.f32.mxu0 0.0
    %842 = vmatmul.mubr.f32.gmra.mxu0 %v775
    %v843 = vpop.f32.mrf.mxu0
    %v844 = vadd.f32 0.0, %v843
    %v845 = vpop.f32.mrf.mxu0
    %846 = vdwg.mxu0
    %v847 = vadd.f32 %v774, %v844
    %v848 = vxor.u32 %v847, 2147483648
    %v849 = vmul.f32 %v848, 1.442695
    %v850 = vpow.pop %v849
    %v851 = vadd.f32 %v850, 1.0
    %v852 = vrcp.pop %v851
    %v853 = vmul.f32 1.0, %v852
    %v854 = vtanh.pop %v847
    %v855 = vmul.f32 %v853, %v762
    %857 = vrot.lane.b32.xlu0 %v854, 64
    %v858 = vpop.permute.xlu0 %857
    %v860 = vmul.f32 %v853, %v858
    %862 = vrot.lane.b32.xlu0 %v860, 32
    %v863 = vpop.permute.xlu0 %862
    %v865 = vadd.f32 %v855, %v863
    %v866 = vtanh.pop %v865
    %868 = vrot.lane.b32.xlu0 %v866, 64
    %v869 = vpop.permute.xlu0 %868
    %v871 = vmul.f32 %v853, %v869
    %873 = vrot.lane.b32.xlu0 %v871, 32
    %v874 = vpop.permute.xlu0 %873
    %876 = vst.msk [vmem:[#allocation3 + $0xc] sm:$0x3] %vm257, %v874
    %v877 = vld [vmem:[#allocation2 + $0xe] sm:$0x3]
    %v878 = vsel %vm150, %v874, 0
    %880 = vmatprep.subr.mxu0 0.0
    %881 = vmatpush1.msra.mxu0 0.0
    %882 = vmatprep.subr.mxu0 0.0
    %883 = vmatpush1.msra.mxu0 0.0
    %884 = vmatprep.subr.mxu0 0.0
    %885 = vmatpush1.msra.mxu0 0.0
    %886 = vmatprep.subr.mxu0 0.0
    %887 = vmatpush1.msra.mxu0 0.0
    %888 = vmatprep.subr.mxu0 0.0
    %889 = vmatpush1.msra.mxu0 0.0
    %890 = vmatprep.subr.mxu0 0.0
    %891 = vmatpush1.msra.mxu0 0.0
    %892 = vmatprep.subr.mxu0 0.0
    %893 = vmatpush1.msra.mxu0 0.0
    %894 = vmatprep.subr.mxu0 0.0
    %895 = vmatpush1.msra.mxu0 0.0
    %896 = vmatprep.subr.mxu0 0.0
    %897 = vmatpush1.msra.mxu0 0.0
    %898 = vmatprep.subr.mxu0 0.0
    %899 = vmatpush1.msra.mxu0 0.0
    %900 = vmatprep.subr.mxu0 0.0
    %901 = vmatpush1.msra.mxu0 0.0
    %902 = vmatprep.subr.mxu0 0.0
    %903 = vmatpush1.msra.mxu0 0.0
    %904 = vmatprep.subr.mxu0 0.0
    %905 = vmatpush1.msra.mxu0 %v146
    %906 = vmatprep.subr.mxu0 0.0
    %907 = vmatpush1.msra.mxu0 %v145
    %908 = vmatprep.subr.mxu0 0.0
    %909 = vmatpush1.msra.mxu0 %v144
    %910 = vmatprep.subr.mxu0 0.0
    %911 = vmatpush1.msra.mxu0 %v143
    %912 = vmatprep.subr.mxu0 0.0
    %913 = vmatpush2.msra.mxu0 0.0
    %914 = vmatprep.subr.mxu0 0.0
    %915 = vmatpush2.msra.mxu0 0.0
    %916 = vmatprep.subr.mxu0 0.0
    %917 = vmatpush2.msra.mxu0 0.0
    %918 = vmatprep.subr.mxu0 0.0
    %919 = vmatpush2.msra.mxu0 0.0
    %920 = vmatprep.subr.mxu0 0.0
    %921 = vmatpush2.msra.mxu0 0.0
    %922 = vmatprep.subr.mxu0 0.0
    %923 = vmatpush2.msra.mxu0 0.0
    %924 = vmatprep.subr.mxu0 0.0
    %925 = vmatpush2.msra.mxu0 0.0
    %926 = vmatprep.subr.mxu0 0.0
    %927 = vmatpush2.msra.mxu0 0.0
    %928 = vmatprep.subr.mxu0 0.0
    %929 = vmatpush2.msra.mxu0 0.0
    %930 = vmatprep.subr.mxu0 0.0
    %931 = vmatpush2.msra.mxu0 0.0
    %932 = vmatprep.subr.mxu0 0.0
    %933 = vmatpush2.msra.mxu0 0.0
    %934 = vmatprep.subr.mxu0 0.0
    %935 = vmatpush2.msra.mxu0 0.0
    %936 = vmatprep.subr.mxu0 0.0
    %937 = vmatpush2.msra.mxu0 0.0
    %938 = vmatprep.subr.mxu0 0.0
    %939 = vmatpush2.msra.mxu0 0.0
    %940 = vmatprep.subr.mxu0 0.0
    %941 = vmatpush2.msra.mxu0 0.0
    %942 = vmatprep.subr.mxu0 0.0
    %943 = vmatpush2.msra.mxu0 0.0
    %944 = vmatprep.mubr.f32.mxu0 0.0
    %945 = vmatmul.mubr.f32.gmra.mxu0 %v878
    %v946 = vpop.f32.mrf.mxu0
    %v947 = vadd.f32 0.0, %v946
    %v948 = vpop.f32.mrf.mxu0
    %949 = vdwg.mxu0
    %v950 = vadd.f32 %v877, %v947
    %v951 = vxor.u32 %v950, 2147483648
    %v952 = vmul.f32 %v951, 1.442695
    %v953 = vpow.pop %v952
    %v954 = vadd.f32 %v953, 1.0
    %v955 = vrcp.pop %v954
    %v956 = vmul.f32 1.0, %v955
    %v957 = vtanh.pop %v950
    %v958 = vmul.f32 %v956, %v865
    %960 = vrot.lane.b32.xlu0 %v957, 64
    %v961 = vpop.permute.xlu0 %960
    %v963 = vmul.f32 %v956, %v961
    %965 = vrot.lane.b32.xlu0 %v963, 32
    %v966 = vpop.permute.xlu0 %965
    %v968 = vadd.f32 %v958, %v966
    %v969 = vtanh.pop %v968
    %971 = vrot.lane.b32.xlu0 %v969, 64
    %v972 = vpop.permute.xlu0 %971
    %v974 = vmul.f32 %v956, %v972
    %976 = vrot.lane.b32.xlu0 %v974, 32
    %v977 = vpop.permute.xlu0 %976
    %979 = vst.msk [vmem:[#allocation3 + $0xe] sm:$0x3] %vm257, %v977
    %980 = vst.msk [vmem:[#allocation8] sm:$0x3] %vm257, %v977
    %982 = vrot.lane.b32.xlu0 %v968, 96
    %v983 = vpop.permute.xlu0 %982
    %985 = vst.msk [vmem:[#allocation10] sm:$0x3] %vm257, %v983
    %v986 = vld [vmem:[#allocation3] sm:$0xff]
    %v987 = vld [vmem:[#allocation3 + $0x8] sm:$0xff]
    %v988 = vld [vmem:[%s4] sm:$0xff]
    %v989 = vld [vmem:[%s4 + $0x8] sm:$0xff]
    %v990 = vld [vmem:[%s4 + $0x10] sm:$0xff]
    %v991 = vld [vmem:[%s4 + $0x18] sm:$0xff]
    %v992 = vld [vmem:[%s5] sm:$0x1]
    %v994 = vlaneseq
    %v995 = vshrl.u32 %v994, 7
    %v996 = vsub.s32 0, %v995
    %v997 = vrot.slane %v992, %v996
    %v1000 = vsel %vm150, %v986, 0
    %v1003 = vsel %vm150, %v987, 0
    %1005 = vmatprep.subr.mxu0 0.0
    %1006 = vmatpush1.msra.mxu0 0.0
    %1007 = vmatprep.subr.mxu0 0.0
    %1008 = vmatpush1.msra.mxu0 0.0
    %1009 = vmatprep.subr.mxu0 0.0
    %1010 = vmatpush1.msra.mxu0 0.0
    %1011 = vmatprep.subr.mxu0 0.0
    %1012 = vmatpush1.msra.mxu0 0.0
    %1013 = vmatprep.subr.mxu0 0.0
    %1014 = vmatpush1.msra.mxu0 0.0
    %1015 = vmatprep.subr.mxu0 0.0
    %1016 = vmatpush1.msra.mxu0 0.0
    %1017 = vmatprep.subr.mxu0 0.0
    %1018 = vmatpush1.msra.mxu0 0.0
    %1019 = vmatprep.subr.mxu0 0.0
    %1020 = vmatpush1.msra.mxu0 0.0
    %1021 = vmatprep.subr.mxu0 0.0
    %1022 = vmatpush1.msra.mxu0 0.0
    %1023 = vmatprep.subr.mxu0 0.0
    %1024 = vmatpush1.msra.mxu0 0.0
    %1025 = vmatprep.subr.mxu0 0.0
    %1026 = vmatpush1.msra.mxu0 0.0
    %1027 = vmatprep.subr.mxu0 0.0
    %1028 = vmatpush1.msra.mxu0 0.0
    %1029 = vmatprep.subr.mxu0 0.0
    %1030 = vmatpush1.msra.mxu0 %v991
    %1031 = vmatprep.subr.mxu0 0.0
    %1032 = vmatpush1.msra.mxu0 %v990
    %1033 = vmatprep.subr.mxu0 0.0
    %1034 = vmatpush1.msra.mxu0 %v989
    %1035 = vmatprep.subr.mxu0 0.0
    %1036 = vmatpush1.msra.mxu0 %v988
    %1037 = vmatprep.subr.mxu0 0.0
    %1038 = vmatpush2.msra.mxu0 0.0
    %1039 = vmatprep.subr.mxu0 0.0
    %1040 = vmatpush2.msra.mxu0 0.0
    %1041 = vmatprep.subr.mxu0 0.0
    %1042 = vmatpush2.msra.mxu0 0.0
    %1043 = vmatprep.subr.mxu0 0.0
    %1044 = vmatpush2.msra.mxu0 0.0
    %1045 = vmatprep.subr.mxu0 0.0
    %1046 = vmatpush2.msra.mxu0 0.0
    %1047 = vmatprep.subr.mxu0 0.0
    %1048 = vmatpush2.msra.mxu0 0.0
    %1049 = vmatprep.subr.mxu0 0.0
    %1050 = vmatpush2.msra.mxu0 0.0
    %1051 = vmatprep.subr.mxu0 0.0
    %1052 = vmatpush2.msra.mxu0 0.0
    %1053 = vmatprep.subr.mxu0 0.0
    %1054 = vmatpush2.msra.mxu0 0.0
    %1055 = vmatprep.subr.mxu0 0.0
    %1056 = vmatpush2.msra.mxu0 0.0
    %1057 = vmatprep.subr.mxu0 0.0
    %1058 = vmatpush2.msra.mxu0 0.0
    %1059 = vmatprep.subr.mxu0 0.0
    %1060 = vmatpush2.msra.mxu0 0.0
    %1061 = vmatprep.subr.mxu0 0.0
    %1062 = vmatpush2.msra.mxu0 0.0
    %1063 = vmatprep.subr.mxu0 0.0
    %1064 = vmatpush2.msra.mxu0 0.0
    %1065 = vmatprep.subr.mxu0 0.0
    %1066 = vmatpush2.msra.mxu0 0.0
    %1067 = vmatprep.subr.mxu0 0.0
    %1068 = vmatpush2.msra.mxu0 0.0
    %1069 = vmatprep.mubr.f32.mxu0 0.0
    %1070 = vmatmul.mubr.f32.gmra.mxu0 %v1000
    %v1071 = vpop.f32.mrf.mxu0
    %v1072 = vadd.f32 %v997, %v1071
    %v1073 = vpop.f32.mrf.mxu0
    %1074 = vmatprep.mubr.f32.mxu0 0.0
    %1075 = vmatmul.mubr.f32.gmra.mxu0 %v1003
    %v1076 = vpop.f32.mrf.mxu0
    %v1077 = vadd.f32 %v997, %v1076
    %v1078 = vpop.f32.mrf.mxu0
    %1079 = vdwg.mxu0
    %vm1080 = vcmask 80896
    %1081 = vst.msk [vmem:[#allocation7] sm:$0xff] %vm1080, %v1072
    %1082 = vst.msk [vmem:[#allocation7 + $0x8] sm:$0xff] %vm1080, %v1077
    // Predicated region
    $region38: #{tpu_custom_call.1} parent=1 // pred_check
      _
    $region39: #{tpu_custom_call.1} parent=1 // pred_check_branch
      %1084 = sbr.rel (0) target = $region41
    $region40: #{tpu_custom_call.1} parent=1 // pred_region
      %s1086 = ssub.s32 256, 256
      %1087 = vsyncadd [#allocation6], %s1086
      %s1088 = sshll.u32 [#allocation7], 4
      %s1089 = int_to_ptr.vmem [resolvable:$true] %s1088
      %1094 = dma.vmem_to_hbm [thread:$0]  %s1089, 256, %s8, [#allocation6], 128, 128, 8
    $region41: #{tpu_custom_call.1} parent=1 // pred_fallthru
      _
    // Predicated region
    $region42: #{tpu_custom_call.1} parent=1 // pred_check
      _
    $region43: #{tpu_custom_call.1} parent=1 // pred_check_branch
      %1096 = sbr.rel (0) target = $region45
    $region44: #{tpu_custom_call.1} parent=1 // pred_region
      %s1098 = ssub.s32 32, 32
      %1099 = vsyncadd [#allocation9], %s1098
      %s1101 = sshll.u32 [#allocation8], 4
      %s1102 = int_to_ptr.vmem [resolvable:$true] %s1101
      %1104 = dma.vmem_to_hbm [thread:$0]  %s1102, 32, %s9, [#allocation9]
    $region45: #{tpu_custom_call.1} parent=1 // pred_fallthru
      _
    // Predicated region
    $region46: #{tpu_custom_call.1} parent=1 // pred_check
      _
    $region47: #{tpu_custom_call.1} parent=1 // pred_check_branch
      %1106 = sbr.rel (0) target = $region49
    $region48: #{tpu_custom_call.1} parent=1 // pred_region
      %s1108 = ssub.s32 32, 32
      %1109 = vsyncadd [#allocation9], %s1108
      %s1111 = sshll.u32 [#allocation10], 4
      %s1112 = int_to_ptr.vmem [resolvable:$true] %s1111
      %1114 = dma.vmem_to_hbm [thread:$0]  %s1112, 32, %s10, [#allocation9]
    $region49: #{tpu_custom_call.1} parent=1 // pred_fallthru
      _
    // Predicated region
    $region50: #{tpu_custom_call.1} parent=1 // pred_check
      _
    $region51: #{tpu_custom_call.1} parent=1 // pred_check_branch
      %1116 = sbr.rel (0) target = $region53
    $region52: #{tpu_custom_call.1} parent=1 // pred_region
      %1117 = dma.done [#allocation6], 256
    $region53: #{tpu_custom_call.1} parent=1 // pred_fallthru
      _
    // Predicated region
    $region54: #{tpu_custom_call.1} parent=1 // pred_check
      _
    $region55: #{tpu_custom_call.1} parent=1 // pred_check_branch
      %1119 = sbr.rel (0) target = $region57
    $region56: #{tpu_custom_call.1} parent=1 // pred_region
      %1120 = dma.done [#allocation9], 32
    $region57: #{tpu_custom_call.1} parent=1 // pred_fallthru
      _
    // Predicated region
    $region58: #{tpu_custom_call.1} parent=1 // pred_check
      _
    $region59: #{tpu_custom_call.1} parent=1 // pred_check_branch
      %1122 = sbr.rel (0) target = $region61
    $region60: #{tpu_custom_call.1} parent=1 // pred_region
      %1123 = dma.done [#allocation9], 32
    $region61: #{tpu_custom_call.1} parent=1 // pred_fallthru
      _
    %1124 = vsyncpa [#allocation5], 1
    %1125 = vsyncpa [#allocation6], 1
    %1126 = vsyncpa [#allocation9], 1

</llo_original>
